<compile_context>
chip_gen: v7x
topology: tpu7x:2x2x1
jax: 0.10.0
libtpu: 0.0.40
codegen_flags: <defaults>
</compile_context>

<pallas_src>
import functools

import jax
import jax.numpy as jnp
from jax.experimental import pallas as pl
from jax.experimental.pallas import tpu as pltpu


def _round_up(n, m):
    return ((n + m - 1) // m) * m


def _vmem_capacity_bytes():
    try:
        info = pltpu.get_tpu_info()
        cap = int(getattr(info, "vmem_capacity_bytes", 0))
        if cap > 0:
            return cap
    except Exception:
        pass
    return 64 << 20  # conservative default (v7x per-core VMEM)


def _improvement_kernel(x_ref, weg_ref, wd_ref,                 # inputs
                        xr_ref, psz_ref, psg_ref, psr_ref,      # outputs
                        *, hid_pad, batch, tile_b, need_mask):
    x = x_ref[...]                                              # (tile_b, D) stream dtype

    if need_mask:  # static flag: only emitted when the last batch tile is ragged
        i = pl.program_id(0)
        rows = i * tile_b + jax.lax.broadcasted_iota(jnp.int32, (tile_b, 1), 0)
        x = jnp.where(rows < batch, x, jnp.zeros_like(x))

    # Fused encoder + guidance matmul: one MXU pass over x yields [z | g].
    zg = jnp.dot(x, weg_ref[...], preferred_element_type=jnp.float32)   # (tile_b, 2*HP)
    z = zg[:, :hid_pad]                                                  # (tile_b, HP)
    g = zg[:, hid_pad:]                                                  # (tile_b, HP)

    # Decoder matmul (padded hidden rows of W_d are zero).
    x_recon = jnp.dot(z.astype(wd_ref.dtype), wd_ref[...],
                      preferred_element_type=jnp.float32)                # (tile_b, D) f32
    xr_ref[...] = x_recon.astype(xr_ref.dtype)

    # Per-tile, lane-dense partial sums (only a sublane reduce here; the cheap
    # cross-lane / cross-tile reduce happens once in the wrapper).
    psz_ref[0] = jnp.sum(z * z, axis=0, keepdims=True)                   # (1, HP)
    gdiff = g - z
    psg_ref[0] = jnp.sum(gdiff * gdiff, axis=0, keepdims=True)           # (1, HP)
    rdiff = x_recon - x.astype(jnp.float32)
    psr_ref[0] = jnp.sum(rdiff * rdiff, axis=0, keepdims=True)           # (1, D)


def prepare_weights(w_enc, w_dec, w_gui, *, use_bf16_matmul=False):
    """One-time weight prep: zero-pad hidden->128 multiple, fuse [W_e | W_g], optional bf16.

    The bf16 path is beneficial on all generations (v5e/v6e/v7x): the MXU is
    bf16-native everywhere and it halves weight/activation DMA bytes; all
    elementwise / reduction math stays f32 inside the kernel.
    """
    D, H = w_enc.shape
    HP = _round_up(H, 128)
    wdt = jnp.bfloat16 if use_bf16_matmul else jnp.float32
    we = jnp.zeros((D, HP), jnp.float32).at[:, :H].set(w_enc.astype(jnp.float32))
    wg = jnp.zeros((D, HP), jnp.float32).at[:, :H].set(w_gui.astype(jnp.float32))
    w_eg = jnp.concatenate([we, wg], axis=1).astype(wdt)                 # (D, 2*HP)
    w_d = (jnp.zeros((HP, D), jnp.float32)
           .at[:H, :].set(w_dec.astype(jnp.float32)).astype(wdt))        # (HP, D)
    return w_eg, w_d, H


def improvement_forward(x, w_eg, w_d, hid, lambda_val=1.0, gamma_val=1.0,
                        tile_b_target=1024):
    """Returns (total_loss scalar f32, x_recon (B, C, H, W))."""
    B, C, Hs, Ws = x.shape
    D = C * Hs * Ws
    HP = w_eg.shape[1] // 2
    assert w_eg.shape[0] == D and w_d.shape == (HP, D)

    stream_dt = w_eg.dtype            # bf16 on the fast path, f32 otherwise
    xr_dt = stream_dt                 # write x_recon in the same (matmul) precision
    # No D padding and no batch zero-pad copy: reshape is metadata-only; the cast is
    # a no-op on the f32 path. In a real pipeline x would already arrive in bf16.
    x2d = x.reshape(B, D).astype(stream_dt)

    # --- tile size from the VMEM budget -------------------------------------
    cap = _vmem_capacity_bytes()
    sb = jnp.dtype(stream_dt).itemsize
    rb = jnp.dtype(xr_dt).itemsize
    wb = jnp.dtype(w_eg.dtype).itemsize
    weight_bytes = (w_eg.size + w_d.size) * wb

    def tile_bytes(tb):
        return (2 * tb * D * sb          # double-buffered x tiles
                + 2 * tb * D * rb        # double-buffered x_recon tiles
                + tb * 2 * HP * 4        # zg (f32)
                + 3 * tb * D * 4)        # f32 x_recon / rdiff / upcast temporaries

    budget = int(cap * 0.6) - 2 * weight_bytes - (4 << 20)
    tile_b = 8
    for cand in (1024, 512, 256, 128, 64, 32, 16, 8):
        if tile_bytes(cand) <= budget:
            tile_b = cand
            break
    if B <= tile_b:
        tile_b = B                        # single tile, block == full batch extent
    grid_b = pl.cdiv(B, tile_b)
    need_mask = (B % tile_b) != 0

    vmem_limit = int(min(max(2 * weight_bytes + tile_bytes(tile_b) + (16 << 20),
                             32 << 20),
                         int(cap * 0.85)))

    kernel = functools.partial(
        _improvement_kernel,
        hid_pad=HP, batch=B, tile_b=tile_b, need_mask=need_mask,
    )

    flops = 6 * grid_b * tile_b * D * HP          # fused [z|g] dot + decoder dot
    bytes_accessed = (B * D * sb + weight_bytes + B * D * rb
                      + grid_b * (2 * HP + D) * 4)

    xr2d, psz, psg, psr = pl.pallas_call(
        kernel,
        out_shape=(
            jax.ShapeDtypeStruct((B, D), xr_dt),             # x_recon (lane-dense)
            jax.ShapeDtypeStruct((grid_b, 1, HP), jnp.float32),   # sum z^2 per tile
            jax.ShapeDtypeStruct((grid_b, 1, HP), jnp.float32),   # sum (g-z)^2 per tile
            jax.ShapeDtypeStruct((grid_b, 1, D), jnp.float32),    # sum (xr-x)^2 per tile
        ),
        grid=(grid_b,),
        in_specs=[
            pl.BlockSpec((tile_b, D), lambda i: (i, 0)),      # x tile (streamed)
            pl.BlockSpec((D, 2 * HP), lambda i: (0, 0)),      # fused [W_e|W_g] (resident)
            pl.BlockSpec((HP, D), lambda i: (0, 0)),          # W_d (resident)
        ],
        out_specs=(
            pl.BlockSpec((tile_b, D), lambda i: (i, 0)),
            pl.BlockSpec((1, 1, HP), lambda i: (i, 0, 0)),
            pl.BlockSpec((1, 1, HP), lambda i: (i, 0, 0)),
            pl.BlockSpec((1, 1, D), lambda i: (i, 0, 0)),
        ),
        compiler_params=pltpu.CompilerParams(
            # No resident accumulator across the batch axis anymore -> safe to
            # shard tiles across both TensorCores on v7x.
            dimension_semantics=("parallel",),
            vmem_limit_bytes=vmem_limit,
        ),
        cost_estimate=pl.CostEstimate(flops=flops, transcendentals=0,
                                      bytes_accessed=bytes_accessed),
    )(x2d, w_eg, w_d)

    # Tiny final reductions + loss formula (exactly the module's forward math).
    bcr = jnp.sum(psz) / (B * hid)                       # mean(z**2)
    gui = jnp.sum(psg) / (B * hid)                       # mean((g - z)**2)
    mse = jnp.sum(psr) / (B * D)                         # mse(x_recon, x)
    similarity = 1.0 - mse
    recon_loss = mse + gamma_val * (1.0 - similarity)
    total_loss = bcr + lambda_val * gui + gamma_val * recon_loss

    x_recon = xr2d.reshape(B, C, Hs, Ws)
    return total_loss, x_recon


def _reference(x, w_enc, w_dec, w_gui, lambda_val=1.0, gamma_val=1.0):
    B, C, H, W = x.shape
    D = C * H * W
    xf = x.reshape(B, D).astype(jnp.float32)
    z = xf @ w_enc
    xr = z @ w_dec
    bcr = jnp.mean(z * z)
    gui = jnp.mean((xf @ w_gui - z) ** 2)
    mse = jnp.mean((xr - xf) ** 2)
    recon = mse + gamma_val * (1.0 - (1.0 - mse))
    return bcr + lambda_val * gui + gamma_val * recon, xr.reshape(B, C, H, W)


if __name__ == "__main__":
    # Small shapes consistent with the module's forward: batch=2, channels=4, 16x16 spatial.
    B, C, H, W = 2, 4, 16, 16
    D = C * H * W
    HID = 32

    key = jax.random.PRNGKey(0)
    kx, ke, kd, kg = jax.random.split(key, 4)
    x = jax.random.normal(kx, (B, C, H, W), dtype=jnp.float32)
    # Deterministic synthetic "weights" for the injected submodules.
    w_enc = jax.random.normal(ke, (D, HID), dtype=jnp.float32) * 0.05
    w_dec = jax.random.normal(kd, (HID, D), dtype=jnp.float32) * 0.05
    w_gui = jax.random.normal(kg, (D, HID), dtype=jnp.float32) * 0.05

    ref_loss, ref_recon = _reference(x, w_enc, w_dec, w_gui, 1.0, 1.0)

    # --- f32 matmul path (tight tolerance) ---
    w_eg32, w_d32, hid = prepare_weights(w_enc, w_dec, w_gui, use_bf16_matmul=False)
    total_loss, x_recon = improvement_forward(x, w_eg32, w_d32, hid,
                                              lambda_val=1.0, gamma_val=1.0)
    jax.block_until_ready((total_loss, x_recon))
    assert jnp.allclose(total_loss, ref_loss, rtol=1e-4, atol=1e-4), (total_loss, ref_loss)
    assert jnp.allclose(x_recon, ref_recon, rtol=1e-4, atol=1e-4)

    # --- bf16 streaming / f32 accumulation path (fast path on all generations) ---
    # Note: bcr/gui use bf16-precision z, so the loss drifts at the ~1e-2 relative
    # level; tolerance is loosened accordingly.
    w_eg16, w_d16, hid = prepare_weights(w_enc, w_dec, w_gui, use_bf16_matmul=True)
    total_bf16, recon_bf16 = improvement_forward(x, w_eg16, w_d16, hid,
                                                 lambda_val=1.0, gamma_val=1.0)
    jax.block_until_ready((total_bf16, recon_bf16))
    assert jnp.allclose(total_bf16, ref_loss, rtol=5e-2, atol=5e-2), (total_bf16, ref_loss)
    assert jnp.allclose(recon_bf16.astype(jnp.float32), ref_recon, rtol=5e-2, atol=5e-2)

    print("KERNEL_OK")
</pallas_src>

<mosaic_0001>
module attributes {stable_mosaic.version = 11 : i64} {
  func.func @_improvement_kernel(%arg0: i32, %arg1: memref<2x1024xf32, #tpu.memory_space<vmem>>, %arg2: memref<1024x256xf32, #tpu.memory_space<vmem>>, %arg3: memref<128x1024xf32, #tpu.memory_space<vmem>>, %arg4: memref<2x1024xf32, #tpu.memory_space<vmem>>, %arg5: memref<1x1x128xf32, #tpu.memory_space<vmem>>, %arg6: memref<1x1x128xf32, #tpu.memory_space<vmem>>, %arg7: memref<1x1x1024xf32, #tpu.memory_space<vmem>>) attributes {dimension_semantics = [#tpu.dimension_semantics<parallel>], iteration_bounds = array<i64: 1>, scalar_prefetch = 0 : i64, scratch_operands = 0 : i64, tpu.core_type = #tpu.core_type<tc>, window_params = [{transform_indices = @transform_0, window_bounds = array<i64: 2, 1024>}, {pipeline_mode = #tpu.pipeline_mode<synchronous>, transform_indices = @transform_1, window_bounds = array<i64: 1024, 256>}, {pipeline_mode = #tpu.pipeline_mode<synchronous>, transform_indices = @transform_2, window_bounds = array<i64: 128, 1024>}, {transform_indices = @transform_3, window_bounds = array<i64: 2, 1024>}, {transform_indices = @transform_4, window_bounds = array<i64: 1, 1, 128>}, {transform_indices = @transform_5, window_bounds = array<i64: 1, 1, 128>}, {transform_indices = @transform_6, window_bounds = array<i64: 1, 1, 1024>}]} {
    %c0 = arith.constant 0 : index
    %c0_0 = arith.constant 0 : index
    %0 = vector.load %arg1[%c0, %c0_0] : memref<2x1024xf32, #tpu.memory_space<vmem>>, vector<2x1024xf32>
    %c0_1 = arith.constant 0 : index
    %c0_2 = arith.constant 0 : index
    %1 = vector.load %arg2[%c0_1, %c0_2] : memref<1024x256xf32, #tpu.memory_space<vmem>>, vector<1024x256xf32>
    %cst = arith.constant dense<0.000000e+00> : vector<2x256xf32>
    %2 = tpu.matmul %0, %1, %cst {dimension_numbers = #tpu.dot_dimension_numbers<[1], [0], [0], [1], [0, 0, 1, 1], [], []>} : vector<2x1024xf32>, vector<1024x256xf32>, vector<2x256xf32> -> vector<2x256xf32>
    %3 = vector.extract_strided_slice %2 {offsets = [0, 0], sizes = [2, 128], strides = [1, 1]} : vector<2x256xf32> to vector<2x128xf32>
    %4 = vector.extract_strided_slice %2 {offsets = [0, 128], sizes = [2, 128], strides = [1, 1]} : vector<2x256xf32> to vector<2x128xf32>
    %c0_3 = arith.constant 0 : index
    %c0_4 = arith.constant 0 : index
    %5 = vector.load %arg3[%c0_3, %c0_4] : memref<128x1024xf32, #tpu.memory_space<vmem>>, vector<128x1024xf32>
    %cst_5 = arith.constant dense<0.000000e+00> : vector<2x1024xf32>
    %6 = tpu.matmul %3, %5, %cst_5 {dimension_numbers = #tpu.dot_dimension_numbers<[1], [0], [0], [1], [0, 0, 1, 1], [], []>} : vector<2x128xf32>, vector<128x1024xf32>, vector<2x1024xf32> -> vector<2x1024xf32>
    %c0_6 = arith.constant 0 : index
    %c0_7 = arith.constant 0 : index
    %7 = vector.load %arg4[%c0_6, %c0_7] : memref<2x1024xf32, #tpu.memory_space<vmem>>, vector<2x1024xf32>
    tpu.vector_store %arg4[%c0_6, %c0_7], %6 {strides = array<i32>} : memref<2x1024xf32, #tpu.memory_space<vmem>>, vector<2x1024xf32>,
    %8 = arith.mulf %3, %3 : vector<2x128xf32>
    %cst_8 = arith.constant dense<0.000000e+00> : vector<128xf32>
    %9 = vector.multi_reduction <add>, %8, %cst_8 [0] : vector<2x128xf32> to vector<128xf32>
    %10 = vector.shape_cast %9 : vector<128xf32> to vector<1x128xf32>
    %c0_9 = arith.constant 0 : index
    %c0_10 = arith.constant 0 : index
    %c0_11 = arith.constant 0 : index
    %11 = vector.load %arg5[%c0_9, %c0_10, %c0_11] : memref<1x1x128xf32, #tpu.memory_space<vmem>>, vector<1x1x128xf32>
    %12 = vector.shape_cast %11 : vector<1x1x128xf32> to vector<1x128xf32>
    %13 = vector.shape_cast %10 : vector<1x128xf32> to vector<1x1x128xf32>
    tpu.vector_store %arg5[%c0_9, %c0_10, %c0_11], %13 {strides = array<i32>} : memref<1x1x128xf32, #tpu.memory_space<vmem>>, vector<1x1x128xf32>,
    %14 = arith.subf %4, %3 : vector<2x128xf32>
    %15 = arith.mulf %14, %14 : vector<2x128xf32>
    %cst_12 = arith.constant dense<0.000000e+00> : vector<128xf32>
    %16 = vector.multi_reduction <add>, %15, %cst_12 [0] : vector<2x128xf32> to vector<128xf32>
    %17 = vector.shape_cast %16 : vector<128xf32> to vector<1x128xf32>
    %c0_13 = arith.constant 0 : index
    %c0_14 = arith.constant 0 : index
    %c0_15 = arith.constant 0 : index
    %18 = vector.load %arg6[%c0_13, %c0_14, %c0_15] : memref<1x1x128xf32, #tpu.memory_space<vmem>>, vector<1x1x128xf32>
    %19 = vector.shape_cast %18 : vector<1x1x128xf32> to vector<1x128xf32>
    %20 = vector.shape_cast %17 : vector<1x128xf32> to vector<1x1x128xf32>
    tpu.vector_store %arg6[%c0_13, %c0_14, %c0_15], %20 {strides = array<i32>} : memref<1x1x128xf32, #tpu.memory_space<vmem>>, vector<1x1x128xf32>,
    %21 = arith.subf %6, %0 : vector<2x1024xf32>
    %22 = arith.mulf %21, %21 : vector<2x1024xf32>
    %cst_16 = arith.constant dense<0.000000e+00> : vector<1024xf32>
    %23 = vector.multi_reduction <add>, %22, %cst_16 [0] : vector<2x1024xf32> to vector<1024xf32>
    %24 = vector.shape_cast %23 : vector<1024xf32> to vector<1x1024xf32>
    %c0_17 = arith.constant 0 : index
    %c0_18 = arith.constant 0 : index
    %c0_19 = arith.constant 0 : index
    %25 = vector.load %arg7[%c0_17, %c0_18, %c0_19] : memref<1x1x1024xf32, #tpu.memory_space<vmem>>, vector<1x1x1024xf32>
    %26 = vector.shape_cast %25 : vector<1x1x1024xf32> to vector<1x1024xf32>
    %27 = vector.shape_cast %24 : vector<1x1024xf32> to vector<1x1x1024xf32>
    tpu.vector_store %arg7[%c0_17, %c0_18, %c0_19], %27 {strides = array<i32>} : memref<1x1x1024xf32, #tpu.memory_space<vmem>>, vector<1x1x1024xf32>,
    return
  }
  func.func @transform_0(%arg0: i32) -> (i32, i32) {
    %c0_i32 = arith.constant 0 : i32
    %c0_i32_0 = arith.constant 0 : i32
    return %arg0, %c0_i32 : i32, i32
  }
  func.func @transform_1(%arg0: i32) -> (i32, i32) {
    %c0_i32 = arith.constant 0 : i32
    %c0_i32_0 = arith.constant 0 : i32
    %c0_i32_1 = arith.constant 0 : i32
    return %c0_i32, %c0_i32_0 : i32, i32
  }
  func.func @transform_2(%arg0: i32) -> (i32, i32) {
    %c0_i32 = arith.constant 0 : i32
    %c0_i32_0 = arith.constant 0 : i32
    %c0_i32_1 = arith.constant 0 : i32
    return %c0_i32, %c0_i32_0 : i32, i32
  }
  func.func @transform_3(%arg0: i32) -> (i32, i32) {
    %c0_i32 = arith.constant 0 : i32
    %c0_i32_0 = arith.constant 0 : i32
    return %arg0, %c0_i32 : i32, i32
  }
  func.func @transform_4(%arg0: i32) -> (i32, i32, i32) {
    %c0_i32 = arith.constant 0 : i32
    %c0_i32_0 = arith.constant 0 : i32
    %c0_i32_1 = arith.constant 0 : i32
    return %arg0, %c0_i32, %c0_i32_0 : i32, i32, i32
  }
  func.func @transform_5(%arg0: i32) -> (i32, i32, i32) {
    %c0_i32 = arith.constant 0 : i32
    %c0_i32_0 = arith.constant 0 : i32
    %c0_i32_1 = arith.constant 0 : i32
    return %arg0, %c0_i32, %c0_i32_0 : i32, i32, i32
  }
  func.func @transform_6(%arg0: i32) -> (i32, i32, i32) {
    %c0_i32 = arith.constant 0 : i32
    %c0_i32_0 = arith.constant 0 : i32
    %c0_i32_1 = arith.constant 0 : i32
    return %arg0, %c0_i32, %c0_i32_0 : i32, i32, i32
  }
}

</mosaic_0001>

<llo_original>
// kernel: tpu_custom_call.1
$region0: #{tpu_custom_call.1}
  #allocation0 [shape = 'u32[]', space=smem, size = 0x4, offset = 0x4, fixed_abs, tag = 'smem constant byte address 0x4 - core index']
  #allocation1 [shape = 'u32[144,128]{1,0:T(1,128)}', space=vmem, size = 0x12000, scoped, tag = 'internal scratch']
  %s0 = inlined_call_operand.hbm [shape: f32[2,1024], index: 0, kind: input, shape index: {}]
  %s1 = inlined_call_operand.hbm [shape: f32[1024,256], index: 1, kind: input, shape index: {}]
  %s2 = inlined_call_operand.hbm [shape: f32[128,1024], index: 2, kind: input, shape index: {}]
  %s3 = inlined_call_operand.hbm [shape: f32[2,1024], index: 3, kind: output, shape index: {0}]
  %s4 = inlined_call_operand.hbm [shape: f32[1,1,128], index: 4, kind: output, shape index: {1}]
  %s5 = inlined_call_operand.hbm [shape: f32[1,1,128], index: 5, kind: output, shape index: {2}]
  %s6 = inlined_call_operand.hbm [shape: f32[1,1,1024], index: 6, kind: output, shape index: {3}]
  %7 = xla_tuple %s3, %s4, %s5, %s6
  %s8 = sld [smem:[#allocation0]]
  $region58: #{tpu_custom_call.1} parent=0
    _
  %s10 = ssub.s32 1, %s8
  %s11 = scalar_select 0, %s10, %s8
  $region1: #{tpu_custom_call.1} parent=0
    #allocation2 [shape = 'u8[8192]{0}', space=vmem, size = 0x2000, scoped, tag = 'input window, operand 0, single buffered']
    #allocation3 [shape = 's32[1]{0}', space=sflag, size = 0x4, scoped, tag = 'scoped memory for tpu_custom_call.1']
    #allocation4 [shape = 's32[1]{0}', space=sflag, size = 0x4, scoped, tag = 'scoped memory for tpu_custom_call.1']
    #allocation5 [shape = 'u8[1048576]{0}', space=vmem, size = 0x100000, scoped, tag = 'input window, operand 1, single buffered']
    #allocation6 [shape = 's32[1]{0}', space=sflag, size = 0x4, scoped, tag = 'scoped memory for tpu_custom_call.1']
    #allocation7 [shape = 'u8[524288]{0}', space=vmem, size = 0x80000, scoped, tag = 'input window, operand 2, single buffered']
    #allocation8 [shape = 'u8[8192]{0}', space=vmem, size = 0x2000, scoped, tag = 'output window, operand 0, single buffered']
    #allocation9 [shape = 'u8[512]{0}', space=vmem, size = 0x400, scoped, tag = 'output window, operand 1, single buffered']
    #allocation10 [shape = 's32[1]{0}', space=sflag, size = 0x4, scoped, tag = 'scoped memory for tpu_custom_call.1']
    #allocation11 [shape = 'u8[512]{0}', space=vmem, size = 0x400, scoped, tag = 'output window, operand 2, single buffered']
    #allocation12 [shape = 'u8[4096]{0}', space=vmem, size = 0x1000, scoped, tag = 'output window, operand 3, single buffered']
    #allocation13 [shape = 's32[1]{0}', space=sflag, size = 0x4, scoped, tag = 'scoped memory for tpu_custom_call.1']
    %12 = vsyncpa [#allocation3], 0
    %13 = vsyncpa [#allocation6], 0
    %14 = vsyncpa [#allocation4], 0
    %15 = vsyncpa [#allocation10], 0
    %16 = vsyncpa [#allocation13], 0
    // Predicated region
    $region2: #{tpu_custom_call.1} parent=1 // pred_check
      _
    $region3: #{tpu_custom_call.1} parent=1 // pred_check_branch
      %18 = sbr.rel (0) target = $region5
    $region4: #{tpu_custom_call.1} parent=1 // pred_region
      %s20 = ssub.s32 256, 256
      %21 = vsyncadd [#allocation3], %s20
      %s23 = sshll.u32 [#allocation2], 4
      %s24 = int_to_ptr.vmem [resolvable:$true] %s23
      %26 = dma.hbm_to_vmem [thread:$0]  %s0, 256, %s24, [#allocation3]
    $region5: #{tpu_custom_call.1} parent=1 // pred_fallthru
      _
    // Predicated region
    $region6: #{tpu_custom_call.1} parent=1 // pred_check
      _
    $region7: #{tpu_custom_call.1} parent=1 // pred_check_branch
      %28 = sbr.rel (0) target = $region9
    $region8: #{tpu_custom_call.1} parent=1 // pred_region
      %s30 = ssub.s32 32768, 32768
      %31 = vsyncadd [#allocation6], %s30
      %s32 = sshll.u32 [#allocation5], 4
      %s33 = int_to_ptr.vmem [resolvable:$true] %s32
      %38 = dma.hbm_to_vmem [thread:$0]  %s1, 32768, %s33, [#allocation6], 256, 256, 16
    $region9: #{tpu_custom_call.1} parent=1 // pred_fallthru
      _
    // Predicated region
    $region10: #{tpu_custom_call.1} parent=1 // pred_check
      _
    $region11: #{tpu_custom_call.1} parent=1 // pred_check_branch
      %40 = sbr.rel (0) target = $region13
    $region12: #{tpu_custom_call.1} parent=1 // pred_region
      %s42 = ssub.s32 16384, 16384
      %43 = vsyncadd [#allocation6], %s42
      %s44 = sshll.u32 [#allocation7], 4
      %s45 = int_to_ptr.vmem [resolvable:$true] %s44
      %50 = dma.hbm_to_vmem [thread:$0]  %s2, 16384, %s45, [#allocation6], 1024, 1024, 64
    $region13: #{tpu_custom_call.1} parent=1 // pred_fallthru
      _
    // Predicated region
    $region14: #{tpu_custom_call.1} parent=1 // pred_check
      _
    $region15: #{tpu_custom_call.1} parent=1 // pred_check_branch
      %52 = sbr.rel (0) target = $region17
    $region16: #{tpu_custom_call.1} parent=1 // pred_region
      %53 = dma.done [#allocation3], 256
    $region17: #{tpu_custom_call.1} parent=1 // pred_fallthru
      _
    // Predicated region
    $region18: #{tpu_custom_call.1} parent=1 // pred_check
      _
    $region19: #{tpu_custom_call.1} parent=1 // pred_check_branch
      %55 = sbr.rel (0) target = $region21
    $region20: #{tpu_custom_call.1} parent=1 // pred_region
      %56 = dma.done [#allocation6], 32768
    $region21: #{tpu_custom_call.1} parent=1 // pred_fallthru
      _
    // Predicated region
    $region22: #{tpu_custom_call.1} parent=1 // pred_check
      _
    $region23: #{tpu_custom_call.1} parent=1 // pred_check_branch
      %58 = sbr.rel (0) target = $region25
    $region24: #{tpu_custom_call.1} parent=1 // pred_region
      %59 = dma.done [#allocation6], 16384
    $region25: #{tpu_custom_call.1} parent=1 // pred_fallthru
      _
    %v60 = vld [vmem:[#allocation2] sm:$0xff]
    %v61 = vld [vmem:[#allocation2 + $0x8] sm:$0xff]
    %v62 = vld [vmem:[#allocation5] sm:$0xff]
    %v63 = vld [vmem:[#allocation5 + $0x8] sm:$0xff]
    %v64 = vld [vmem:[#allocation5 + $0x10] sm:$0xff]
    %v65 = vld [vmem:[#allocation5 + $0x18] sm:$0xff]
    %v66 = vld [vmem:[#allocation5 + $0x20] sm:$0xff]
    %v67 = vld [vmem:[#allocation5 + $0x28] sm:$0xff]
    %v68 = vld [vmem:[#allocation5 + $0x30] sm:$0xff]
    %v69 = vld [vmem:[#allocation5 + $0x38] sm:$0xff]
    %v70 = vld [vmem:[#allocation5 + $0x40] sm:$0xff]
    %v71 = vld [vmem:[#allocation5 + $0x48] sm:$0xff]
    %v72 = vld [vmem:[#allocation5 + $0x50] sm:$0xff]
    %v73 = vld [vmem:[#allocation5 + $0x58] sm:$0xff]
    %v74 = vld [vmem:[#allocation5 + $0x60] sm:$0xff]
    %v75 = vld [vmem:[#allocation5 + $0x68] sm:$0xff]
    %v76 = vld [vmem:[#allocation5 + $0x70] sm:$0xff]
    %v77 = vld [vmem:[#allocation5 + $0x78] sm:$0xff]
    %v78 = vld [vmem:[#allocation5 + $0x80] sm:$0xff]
    %v79 = vld [vmem:[#allocation5 + $0x88] sm:$0xff]
    %v80 = vld [vmem:[#allocation5 + $0x90] sm:$0xff]
    %v81 = vld [vmem:[#allocation5 + $0x98] sm:$0xff]
    %v82 = vld [vmem:[#allocation5 + $0xa0] sm:$0xff]
    %v83 = vld [vmem:[#allocation5 + $0xa8] sm:$0xff]
    %v84 = vld [vmem:[#allocation5 + $0xb0] sm:$0xff]
    %v85 = vld [vmem:[#allocation5 + $0xb8] sm:$0xff]
    %v86 = vld [vmem:[#allocation5 + $0xc0] sm:$0xff]
    %v87 = vld [vmem:[#allocation5 + $0xc8] sm:$0xff]
    %v88 = vld [vmem:[#allocation5 + $0xd0] sm:$0xff]
    %v89 = vld [vmem:[#allocation5 + $0xd8] sm:$0xff]
    %v90 = vld [vmem:[#allocation5 + $0xe0] sm:$0xff]
    %v91 = vld [vmem:[#allocation5 + $0xe8] sm:$0xff]
    %v92 = vld [vmem:[#allocation5 + $0xf0] sm:$0xff]
    %v93 = vld [vmem:[#allocation5 + $0xf8] sm:$0xff]
    %v94 = vld [vmem:[#allocation5 + $0x100] sm:$0xff]
    %v95 = vld [vmem:[#allocation5 + $0x108] sm:$0xff]
    %v96 = vld [vmem:[#allocation5 + $0x110] sm:$0xff]
    %v97 = vld [vmem:[#allocation5 + $0x118] sm:$0xff]
    %v98 = vld [vmem:[#allocation5 + $0x120] sm:$0xff]
    %v99 = vld [vmem:[#allocation5 + $0x128] sm:$0xff]
    %v100 = vld [vmem:[#allocation5 + $0x130] sm:$0xff]
    %v101 = vld [vmem:[#allocation5 + $0x138] sm:$0xff]
    %v102 = vld [vmem:[#allocation5 + $0x140] sm:$0xff]
    %v103 = vld [vmem:[#allocation5 + $0x148] sm:$0xff]
    %v104 = vld [vmem:[#allocation5 + $0x150] sm:$0xff]
    %v105 = vld [vmem:[#allocation5 + $0x158] sm:$0xff]
    %v106 = vld [vmem:[#allocation5 + $0x160] sm:$0xff]
    %v107 = vld [vmem:[#allocation5 + $0x168] sm:$0xff]
    %v108 = vld [vmem:[#allocation5 + $0x170] sm:$0xff]
    %v109 = vld [vmem:[#allocation5 + $0x178] sm:$0xff]
    %v110 = vld [vmem:[#allocation5 + $0x180] sm:$0xff]
    %v111 = vld [vmem:[#allocation5 + $0x188] sm:$0xff]
    %v112 = vld [vmem:[#allocation5 + $0x190] sm:$0xff]
    %v113 = vld [vmem:[#allocation5 + $0x198] sm:$0xff]
    %v114 = vld [vmem:[#allocation5 + $0x1a0] sm:$0xff]
    %v115 = vld [vmem:[#allocation5 + $0x1a8] sm:$0xff]
    %v116 = vld [vmem:[#allocation5 + $0x1b0] sm:$0xff]
    %v117 = vld [vmem:[#allocation5 + $0x1b8] sm:$0xff]
    %v118 = vld [vmem:[#allocation5 + $0x1c0] sm:$0xff]
    %v119 = vld [vmem:[#allocation5 + $0x1c8] sm:$0xff]
    %v120 = vld [vmem:[#allocation5 + $0x1d0] sm:$0xff]
    %v121 = vld [vmem:[#allocation5 + $0x1d8] sm:$0xff]
    %v122 = vld [vmem:[#allocation5 + $0x1e0] sm:$0xff]
    %v123 = vld [vmem:[#allocation5 + $0x1e8] sm:$0xff]
    %v124 = vld [vmem:[#allocation5 + $0x1f0] sm:$0xff]
    %v125 = vld [vmem:[#allocation5 + $0x1f8] sm:$0xff]
    %v126 = vld [vmem:[#allocation5 + $0x200] sm:$0xff]
    %v127 = vld [vmem:[#allocation5 + $0x208] sm:$0xff]
    %v128 = vld [vmem:[#allocation5 + $0x210] sm:$0xff]
    %v129 = vld [vmem:[#allocation5 + $0x218] sm:$0xff]
    %v130 = vld [vmem:[#allocation5 + $0x220] sm:$0xff]
    %v131 = vld [vmem:[#allocation5 + $0x228] sm:$0xff]
    %v132 = vld [vmem:[#allocation5 + $0x230] sm:$0xff]
    %v133 = vld [vmem:[#allocation5 + $0x238] sm:$0xff]
    %v134 = vld [vmem:[#allocation5 + $0x240] sm:$0xff]
    %v135 = vld [vmem:[#allocation5 + $0x248] sm:$0xff]
    %v136 = vld [vmem:[#allocation5 + $0x250] sm:$0xff]
    %v137 = vld [vmem:[#allocation5 + $0x258] sm:$0xff]
    %v138 = vld [vmem:[#allocation5 + $0x260] sm:$0xff]
    %v139 = vld [vmem:[#allocation5 + $0x268] sm:$0xff]
    %v140 = vld [vmem:[#allocation5 + $0x270] sm:$0xff]
    %v141 = vld [vmem:[#allocation5 + $0x278] sm:$0xff]
    %v142 = vld [vmem:[#allocation5 + $0x280] sm:$0xff]
    %v143 = vld [vmem:[#allocation5 + $0x288] sm:$0xff]
    %v144 = vld [vmem:[#allocation5 + $0x290] sm:$0xff]
    %v145 = vld [vmem:[#allocation5 + $0x298] sm:$0xff]
    %v146 = vld [vmem:[#allocation5 + $0x2a0] sm:$0xff]
    %v147 = vld [vmem:[#allocation5 + $0x2a8] sm:$0xff]
    %v148 = vld [vmem:[#allocation5 + $0x2b0] sm:$0xff]
    %v149 = vld [vmem:[#allocation5 + $0x2b8] sm:$0xff]
    %v150 = vld [vmem:[#allocation5 + $0x2c0] sm:$0xff]
    %v151 = vld [vmem:[#allocation5 + $0x2c8] sm:$0xff]
    %v152 = vld [vmem:[#allocation5 + $0x2d0] sm:$0xff]
    %v153 = vld [vmem:[#allocation5 + $0x2d8] sm:$0xff]
    %v154 = vld [vmem:[#allocation5 + $0x2e0] sm:$0xff]
    %v155 = vld [vmem:[#allocation5 + $0x2e8] sm:$0xff]
    %v156 = vld [vmem:[#allocation5 + $0x2f0] sm:$0xff]
    %v157 = vld [vmem:[#allocation5 + $0x2f8] sm:$0xff]
    %v158 = vld [vmem:[#allocation5 + $0x300] sm:$0xff]
    %v159 = vld [vmem:[#allocation5 + $0x308] sm:$0xff]
    %v160 = vld [vmem:[#allocation5 + $0x310] sm:$0xff]
    %v161 = vld [vmem:[#allocation5 + $0x318] sm:$0xff]
    %v162 = vld [vmem:[#allocation5 + $0x320] sm:$0xff]
    %v163 = vld [vmem:[#allocation5 + $0x328] sm:$0xff]
    %v164 = vld [vmem:[#allocation5 + $0x330] sm:$0xff]
    %v165 = vld [vmem:[#allocation5 + $0x338] sm:$0xff]
    %v166 = vld [vmem:[#allocation5 + $0x340] sm:$0xff]
    %v167 = vld [vmem:[#allocation5 + $0x348] sm:$0xff]
    %v168 = vld [vmem:[#allocation5 + $0x350] sm:$0xff]
    %v169 = vld [vmem:[#allocation5 + $0x358] sm:$0xff]
    %v170 = vld [vmem:[#allocation5 + $0x360] sm:$0xff]
    %v171 = vld [vmem:[#allocation5 + $0x368] sm:$0xff]
    %v172 = vld [vmem:[#allocation5 + $0x370] sm:$0xff]
    %v173 = vld [vmem:[#allocation5 + $0x378] sm:$0xff]
    %v174 = vld [vmem:[#allocation5 + $0x380] sm:$0xff]
    %v175 = vld [vmem:[#allocation5 + $0x388] sm:$0xff]
    %v176 = vld [vmem:[#allocation5 + $0x390] sm:$0xff]
    %v177 = vld [vmem:[#allocation5 + $0x398] sm:$0xff]
    %v178 = vld [vmem:[#allocation5 + $0x3a0] sm:$0xff]
    %v179 = vld [vmem:[#allocation5 + $0x3a8] sm:$0xff]
    %v180 = vld [vmem:[#allocation5 + $0x3b0] sm:$0xff]
    %v181 = vld [vmem:[#allocation5 + $0x3b8] sm:$0xff]
    %v182 = vld [vmem:[#allocation5 + $0x3c0] sm:$0xff]
    %v183 = vld [vmem:[#allocation5 + $0x3c8] sm:$0xff]
    %v184 = vld [vmem:[#allocation5 + $0x3d0] sm:$0xff]
    %v185 = vld [vmem:[#allocation5 + $0x3d8] sm:$0xff]
    %v186 = vld [vmem:[#allocation5 + $0x3e0] sm:$0xff]
    %v187 = vld [vmem:[#allocation5 + $0x3e8] sm:$0xff]
    %v188 = vld [vmem:[#allocation5 + $0x3f0] sm:$0xff]
    %v189 = vld [vmem:[#allocation5 + $0x3f8] sm:$0xff]
    %v190 = vld [vmem:[#allocation5 + $0x400] sm:$0xff]
    %v191 = vld [vmem:[#allocation5 + $0x408] sm:$0xff]
    %v192 = vld [vmem:[#allocation5 + $0x410] sm:$0xff]
    %v193 = vld [vmem:[#allocation5 + $0x418] sm:$0xff]
    %v194 = vld [vmem:[#allocation5 + $0x420] sm:$0xff]
    %v195 = vld [vmem:[#allocation5 + $0x428] sm:$0xff]
    %v196 = vld [vmem:[#allocation5 + $0x430] sm:$0xff]
    %v197 = vld [vmem:[#allocation5 + $0x438] sm:$0xff]
    %v198 = vld [vmem:[#allocation5 + $0x440] sm:$0xff]
    %v199 = vld [vmem:[#allocation5 + $0x448] sm:$0xff]
    %v200 = vld [vmem:[#allocation5 + $0x450] sm:$0xff]
    %v201 = vld [vmem:[#allocation5 + $0x458] sm:$0xff]
    %v202 = vld [vmem:[#allocation5 + $0x460] sm:$0xff]
    %v203 = vld [vmem:[#allocation5 + $0x468] sm:$0xff]
    %v204 = vld [vmem:[#allocation5 + $0x470] sm:$0xff]
    %v205 = vld [vmem:[#allocation5 + $0x478] sm:$0xff]
    %v206 = vld [vmem:[#allocation5 + $0x480] sm:$0xff]
    %v207 = vld [vmem:[#allocation5 + $0x488] sm:$0xff]
    %v208 = vld [vmem:[#allocation5 + $0x490] sm:$0xff]
    %v209 = vld [vmem:[#allocation5 + $0x498] sm:$0xff]
    %v210 = vld [vmem:[#allocation5 + $0x4a0] sm:$0xff]
    %v211 = vld [vmem:[#allocation5 + $0x4a8] sm:$0xff]
    %v212 = vld [vmem:[#allocation5 + $0x4b0] sm:$0xff]
    %v213 = vld [vmem:[#allocation5 + $0x4b8] sm:$0xff]
    %v214 = vld [vmem:[#allocation5 + $0x4c0] sm:$0xff]
    %v215 = vld [vmem:[#allocation5 + $0x4c8] sm:$0xff]
    %v216 = vld [vmem:[#allocation5 + $0x4d0] sm:$0xff]
    %v217 = vld [vmem:[#allocation5 + $0x4d8] sm:$0xff]
    %v218 = vld [vmem:[#allocation5 + $0x4e0] sm:$0xff]
    %v219 = vld [vmem:[#allocation5 + $0x4e8] sm:$0xff]
    %v220 = vld [vmem:[#allocation5 + $0x4f0] sm:$0xff]
    %v221 = vld [vmem:[#allocation5 + $0x4f8] sm:$0xff]
    %v222 = vld [vmem:[#allocation5 + $0x500] sm:$0xff]
    %v223 = vld [vmem:[#allocation5 + $0x508] sm:$0xff]
    %v224 = vld [vmem:[#allocation5 + $0x510] sm:$0xff]
    %v225 = vld [vmem:[#allocation5 + $0x518] sm:$0xff]
    %v226 = vld [vmem:[#allocation5 + $0x520] sm:$0xff]
    %v227 = vld [vmem:[#allocation5 + $0x528] sm:$0xff]
    %v228 = vld [vmem:[#allocation5 + $0x530] sm:$0xff]
    %v229 = vld [vmem:[#allocation5 + $0x538] sm:$0xff]
    %v230 = vld [vmem:[#allocation5 + $0x540] sm:$0xff]
    %v231 = vld [vmem:[#allocation5 + $0x548] sm:$0xff]
    %v232 = vld [vmem:[#allocation5 + $0x550] sm:$0xff]
    %v233 = vld [vmem:[#allocation5 + $0x558] sm:$0xff]
    %v234 = vld [vmem:[#allocation5 + $0x560] sm:$0xff]
    %v235 = vld [vmem:[#allocation5 + $0x568] sm:$0xff]
    %v236 = vld [vmem:[#allocation5 + $0x570] sm:$0xff]
    %v237 = vld [vmem:[#allocation5 + $0x578] sm:$0xff]
    %v238 = vld [vmem:[#allocation5 + $0x580] sm:$0xff]
    %v239 = vld [vmem:[#allocation5 + $0x588] sm:$0xff]
    %v240 = vld [vmem:[#allocation5 + $0x590] sm:$0xff]
    %v241 = vld [vmem:[#allocation5 + $0x598] sm:$0xff]
    %v242 = vld [vmem:[#allocation5 + $0x5a0] sm:$0xff]
    %v243 = vld [vmem:[#allocation5 + $0x5a8] sm:$0xff]
    %v244 = vld [vmem:[#allocation5 + $0x5b0] sm:$0xff]
    %v245 = vld [vmem:[#allocation5 + $0x5b8] sm:$0xff]
    %v246 = vld [vmem:[#allocation5 + $0x5c0] sm:$0xff]
    %v247 = vld [vmem:[#allocation5 + $0x5c8] sm:$0xff]
    %v248 = vld [vmem:[#allocation5 + $0x5d0] sm:$0xff]
    %v249 = vld [vmem:[#allocation5 + $0x5d8] sm:$0xff]
    %v250 = vld [vmem:[#allocation5 + $0x5e0] sm:$0xff]
    %v251 = vld [vmem:[#allocation5 + $0x5e8] sm:$0xff]
    %v252 = vld [vmem:[#allocation5 + $0x5f0] sm:$0xff]
    %v253 = vld [vmem:[#allocation5 + $0x5f8] sm:$0xff]
    %v254 = vld [vmem:[#allocation5 + $0x600] sm:$0xff]
    %v255 = vld [vmem:[#allocation5 + $0x608] sm:$0xff]
    %v256 = vld [vmem:[#allocation5 + $0x610] sm:$0xff]
    %v257 = vld [vmem:[#allocation5 + $0x618] sm:$0xff]
    %v258 = vld [vmem:[#allocation5 + $0x620] sm:$0xff]
    %v259 = vld [vmem:[#allocation5 + $0x628] sm:$0xff]
    %v260 = vld [vmem:[#allocation5 + $0x630] sm:$0xff]
    %v261 = vld [vmem:[#allocation5 + $0x638] sm:$0xff]
    %v262 = vld [vmem:[#allocation5 + $0x640] sm:$0xff]
    %v263 = vld [vmem:[#allocation5 + $0x648] sm:$0xff]
    %v264 = vld [vmem:[#allocation5 + $0x650] sm:$0xff]
    %v265 = vld [vmem:[#allocation5 + $0x658] sm:$0xff]
    %v266 = vld [vmem:[#allocation5 + $0x660] sm:$0xff]
    %v267 = vld [vmem:[#allocation5 + $0x668] sm:$0xff]
    %v268 = vld [vmem:[#allocation5 + $0x670] sm:$0xff]
    %v269 = vld [vmem:[#allocation5 + $0x678] sm:$0xff]
    %v270 = vld [vmem:[#allocation5 + $0x680] sm:$0xff]
    %v271 = vld [vmem:[#allocation5 + $0x688] sm:$0xff]
    %v272 = vld [vmem:[#allocation5 + $0x690] sm:$0xff]
    %v273 = vld [vmem:[#allocation5 + $0x698] sm:$0xff]
    %v274 = vld [vmem:[#allocation5 + $0x6a0] sm:$0xff]
    %v275 = vld [vmem:[#allocation5 + $0x6a8] sm:$0xff]
    %v276 = vld [vmem:[#allocation5 + $0x6b0] sm:$0xff]
    %v277 = vld [vmem:[#allocation5 + $0x6b8] sm:$0xff]
    %v278 = vld [vmem:[#allocation5 + $0x6c0] sm:$0xff]
    %v279 = vld [vmem:[#allocation5 + $0x6c8] sm:$0xff]
    %v280 = vld [vmem:[#allocation5 + $0x6d0] sm:$0xff]
    %v281 = vld [vmem:[#allocation5 + $0x6d8] sm:$0xff]
    %v282 = vld [vmem:[#allocation5 + $0x6e0] sm:$0xff]
    %v283 = vld [vmem:[#allocation5 + $0x6e8] sm:$0xff]
    %v284 = vld [vmem:[#allocation5 + $0x6f0] sm:$0xff]
    %v285 = vld [vmem:[#allocation5 + $0x6f8] sm:$0xff]
    %v286 = vld [vmem:[#allocation5 + $0x700] sm:$0xff]
    %v287 = vld [vmem:[#allocation5 + $0x708] sm:$0xff]
    %v288 = vld [vmem:[#allocation5 + $0x710] sm:$0xff]
    %v289 = vld [vmem:[#allocation5 + $0x718] sm:$0xff]
    %v290 = vld [vmem:[#allocation5 + $0x720] sm:$0xff]
    %v291 = vld [vmem:[#allocation5 + $0x728] sm:$0xff]
    %v292 = vld [vmem:[#allocation5 + $0x730] sm:$0xff]
    %v293 = vld [vmem:[#allocation5 + $0x738] sm:$0xff]
    %v294 = vld [vmem:[#allocation5 + $0x740] sm:$0xff]
    %v295 = vld [vmem:[#allocation5 + $0x748] sm:$0xff]
    %v296 = vld [vmem:[#allocation5 + $0x750] sm:$0xff]
    %v297 = vld [vmem:[#allocation5 + $0x758] sm:$0xff]
    %v298 = vld [vmem:[#allocation5 + $0x760] sm:$0xff]
    %v299 = vld [vmem:[#allocation5 + $0x768] sm:$0xff]
    %v300 = vld [vmem:[#allocation5 + $0x770] sm:$0xff]
    %v301 = vld [vmem:[#allocation5 + $0x778] sm:$0xff]
    %v302 = vld [vmem:[#allocation5 + $0x780] sm:$0xff]
    %v303 = vld [vmem:[#allocation5 + $0x788] sm:$0xff]
    %v304 = vld [vmem:[#allocation5 + $0x790] sm:$0xff]
    %v305 = vld [vmem:[#allocation5 + $0x798] sm:$0xff]
    %v306 = vld [vmem:[#allocation5 + $0x7a0] sm:$0xff]
    %v307 = vld [vmem:[#allocation5 + $0x7a8] sm:$0xff]
    %v308 = vld [vmem:[#allocation5 + $0x7b0] sm:$0xff]
    %v309 = vld [vmem:[#allocation5 + $0x7b8] sm:$0xff]
    %v310 = vld [vmem:[#allocation5 + $0x7c0] sm:$0xff]
    %v311 = vld [vmem:[#allocation5 + $0x7c8] sm:$0xff]
    %v312 = vld [vmem:[#allocation5 + $0x7d0] sm:$0xff]
    %v313 = vld [vmem:[#allocation5 + $0x7d8] sm:$0xff]
    %v314 = vld [vmem:[#allocation5 + $0x7e0] sm:$0xff]
    %v315 = vld [vmem:[#allocation5 + $0x7e8] sm:$0xff]
    %v316 = vld [vmem:[#allocation5 + $0x7f0] sm:$0xff]
    %v317 = vld [vmem:[#allocation5 + $0x7f8] sm:$0xff]
    %v320 = vcombine.high %v60, %v60
    %v322 = vunpack.c.l.s4 1983009808
    %v323 = vunpack.c.0.s8 %v322
    %v324 = vlaneseq
    %v325 = vshrl.u32 %v324, 7
    %v326 = vsub.s32 %v323, %v325
    %v327 = vrot.slane %v60, %v326
    %v329 = vunpack.c.l.s4 1983009808
    %v330 = vunpack.c.0.s8 %v329
    %v331 = vlaneseq
    %v332 = vshrl.u32 %v331, 7
    %v333 = vsub.s32 %v330, %v332
    %v334 = vrot.slane %v320, %v333
    %v335 = vcombine.high %v327, %v327
    %v336 = vcombine.high %v334, %v334
    %v337 = vcombine.high %v61, %v61
    %v339 = vunpack.c.l.s4 1983009808
    %v340 = vunpack.c.0.s8 %v339
    %v341 = vlaneseq
    %v342 = vshrl.u32 %v341, 7
    %v343 = vsub.s32 %v340, %v342
    %v344 = vrot.slane %v61, %v343
    %v346 = vunpack.c.l.s4 1983009808
    %v347 = vunpack.c.0.s8 %v346
    %v348 = vlaneseq
    %v349 = vshrl.u32 %v348, 7
    %v350 = vsub.s32 %v347, %v349
    %v351 = vrot.slane %v337, %v350
    %v352 = vcombine.high %v344, %v344
    %v353 = vcombine.high %v351, %v351
    %362 = vmatprep.subr.mxu0 %v63
    %363 = vmatpush1.msra.mxu0 %v62
    %364 = vmatprep.subr.mxu0 %v65
    %365 = vmatpush1.msra.mxu0 %v64
    %366 = vmatprep.subr.mxu0 %v67
    %367 = vmatpush1.msra.mxu0 %v66
    %368 = vmatprep.subr.mxu0 %v69
    %369 = vmatpush1.msra.mxu0 %v68
    %370 = vmatprep.subr.mxu0 %v71
    %371 = vmatpush1.msra.mxu0 %v70
    %372 = vmatprep.subr.mxu0 %v73
    %373 = vmatpush1.msra.mxu0 %v72
    %374 = vmatprep.subr.mxu0 %v75
    %375 = vmatpush1.msra.mxu0 %v74
    %376 = vmatprep.subr.mxu0 %v77
    %377 = vmatpush1.msra.mxu0 %v76
    %378 = vmatprep.subr.mxu0 %v79
    %379 = vmatpush1.msra.mxu0 %v78
    %380 = vmatprep.subr.mxu0 %v81
    %381 = vmatpush1.msra.mxu0 %v80
    %382 = vmatprep.subr.mxu0 %v83
    %383 = vmatpush1.msra.mxu0 %v82
    %384 = vmatprep.subr.mxu0 %v85
    %385 = vmatpush1.msra.mxu0 %v84
    %386 = vmatprep.subr.mxu0 %v87
    %387 = vmatpush1.msra.mxu0 %v86
    %388 = vmatprep.subr.mxu0 %v89
    %389 = vmatpush1.msra.mxu0 %v88
    %390 = vmatprep.subr.mxu0 %v91
    %391 = vmatpush1.msra.mxu0 %v90
    %392 = vmatprep.subr.mxu0 %v93
    %393 = vmatpush1.msra.mxu0 %v92
    %394 = vmatprep.subr.mxu0 %v95
    %395 = vmatpush1.msra.mxu0 %v94
    %396 = vmatprep.subr.mxu0 %v97
    %397 = vmatpush1.msra.mxu0 %v96
    %398 = vmatprep.subr.mxu0 %v99
    %399 = vmatpush1.msra.mxu0 %v98
    %400 = vmatprep.subr.mxu0 %v101
    %401 = vmatpush1.msra.mxu0 %v100
    %402 = vmatprep.subr.mxu0 %v103
    %403 = vmatpush1.msra.mxu0 %v102
    %404 = vmatprep.subr.mxu0 %v105
    %405 = vmatpush1.msra.mxu0 %v104
    %406 = vmatprep.subr.mxu0 %v107
    %407 = vmatpush1.msra.mxu0 %v106
    %408 = vmatprep.subr.mxu0 %v109
    %409 = vmatpush1.msra.mxu0 %v108
    %410 = vmatprep.subr.mxu0 %v111
    %411 = vmatpush1.msra.mxu0 %v110
    %412 = vmatprep.subr.mxu0 %v113
    %413 = vmatpush1.msra.mxu0 %v112
    %414 = vmatprep.subr.mxu0 %v115
    %415 = vmatpush1.msra.mxu0 %v114
    %416 = vmatprep.subr.mxu0 %v117
    %417 = vmatpush1.msra.mxu0 %v116
    %418 = vmatprep.subr.mxu0 %v119
    %419 = vmatpush1.msra.mxu0 %v118
    %420 = vmatprep.subr.mxu0 %v121
    %421 = vmatpush1.msra.mxu0 %v120
    %422 = vmatprep.subr.mxu0 %v123
    %423 = vmatpush1.msra.mxu0 %v122
    %424 = vmatprep.subr.mxu0 %v125
    %425 = vmatpush1.msra.mxu0 %v124
    %426 = vmatprep.mubr.f32.mxu0 %v335
    %427 = vmatmul.mubr.f32.gmra.mrb[0].mxu0 %v327
    %v428 = vpop.f32.mrb[0].mxu0
    %v429 = vadd.f32 0.0, %v428
    %v430 = vpop.f32.mrb[0].mxu0
    %v431 = vadd.f32 0.0, %v430
    %432 = vdwg.mxu0
    %433 = vmatprep.subr.mxu0 %v127
    %434 = vmatpush1.msra.mxu0 %v126
    %435 = vmatprep.subr.mxu0 %v129
    %436 = vmatpush1.msra.mxu0 %v128
    %437 = vmatprep.subr.mxu0 %v131
    %438 = vmatpush1.msra.mxu0 %v130
    %439 = vmatprep.subr.mxu0 %v133
    %440 = vmatpush1.msra.mxu0 %v132
    %441 = vmatprep.subr.mxu0 %v135
    %442 = vmatpush1.msra.mxu0 %v134
    %443 = vmatprep.subr.mxu0 %v137
    %444 = vmatpush1.msra.mxu0 %v136
    %445 = vmatprep.subr.mxu0 %v139
    %446 = vmatpush1.msra.mxu0 %v138
    %447 = vmatprep.subr.mxu0 %v141
    %448 = vmatpush1.msra.mxu0 %v140
    %449 = vmatprep.subr.mxu0 %v143
    %450 = vmatpush1.msra.mxu0 %v142
    %451 = vmatprep.subr.mxu0 %v145
    %452 = vmatpush1.msra.mxu0 %v144
    %453 = vmatprep.subr.mxu0 %v147
    %454 = vmatpush1.msra.mxu0 %v146
    %455 = vmatprep.subr.mxu0 %v149
    %456 = vmatpush1.msra.mxu0 %v148
    %457 = vmatprep.subr.mxu0 %v151
    %458 = vmatpush1.msra.mxu0 %v150
    %459 = vmatprep.subr.mxu0 %v153
    %460 = vmatpush1.msra.mxu0 %v152
    %461 = vmatprep.subr.mxu0 %v155
    %462 = vmatpush1.msra.mxu0 %v154
    %463 = vmatprep.subr.mxu0 %v157
    %464 = vmatpush1.msra.mxu0 %v156
    %465 = vmatprep.subr.mxu0 %v159
    %466 = vmatpush1.msra.mxu0 %v158
    %467 = vmatprep.subr.mxu0 %v161
    %468 = vmatpush1.msra.mxu0 %v160
    %469 = vmatprep.subr.mxu0 %v163
    %470 = vmatpush1.msra.mxu0 %v162
    %471 = vmatprep.subr.mxu0 %v165
    %472 = vmatpush1.msra.mxu0 %v164
    %473 = vmatprep.subr.mxu0 %v167
    %474 = vmatpush1.msra.mxu0 %v166
    %475 = vmatprep.subr.mxu0 %v169
    %476 = vmatpush1.msra.mxu0 %v168
    %477 = vmatprep.subr.mxu0 %v171
    %478 = vmatpush1.msra.mxu0 %v170
    %479 = vmatprep.subr.mxu0 %v173
    %480 = vmatpush1.msra.mxu0 %v172
    %481 = vmatprep.subr.mxu0 %v175
    %482 = vmatpush1.msra.mxu0 %v174
    %483 = vmatprep.subr.mxu0 %v177
    %484 = vmatpush1.msra.mxu0 %v176
    %485 = vmatprep.subr.mxu0 %v179
    %486 = vmatpush1.msra.mxu0 %v178
    %487 = vmatprep.subr.mxu0 %v181
    %488 = vmatpush1.msra.mxu0 %v180
    %489 = vmatprep.subr.mxu0 %v183
    %490 = vmatpush1.msra.mxu0 %v182
    %491 = vmatprep.subr.mxu0 %v185
    %492 = vmatpush1.msra.mxu0 %v184
    %493 = vmatprep.subr.mxu0 %v187
    %494 = vmatpush1.msra.mxu0 %v186
    %495 = vmatprep.subr.mxu0 %v189
    %496 = vmatpush1.msra.mxu0 %v188
    %497 = vmatprep.mubr.f32.mxu0 %v336
    %498 = vmatmul.mubr.f32.gmra.mrb[0].mxu0 %v334
    %v499 = vpop.f32.mrb[0].mxu0
    %v500 = vadd.f32 %v429, %v499
    %v501 = vpop.f32.mrb[0].mxu0
    %v502 = vadd.f32 %v431, %v501
    %503 = vdwg.mxu0
    %504 = vmatprep.subr.mxu0 %v191
    %505 = vmatpush1.msra.mxu0 %v190
    %506 = vmatprep.subr.mxu0 %v193
    %507 = vmatpush1.msra.mxu0 %v192
    %508 = vmatprep.subr.mxu0 %v195
    %509 = vmatpush1.msra.mxu0 %v194
    %510 = vmatprep.subr.mxu0 %v197
    %511 = vmatpush1.msra.mxu0 %v196
    %512 = vmatprep.subr.mxu0 %v199
    %513 = vmatpush1.msra.mxu0 %v198
    %514 = vmatprep.subr.mxu0 %v201
    %515 = vmatpush1.msra.mxu0 %v200
    %516 = vmatprep.subr.mxu0 %v203
    %517 = vmatpush1.msra.mxu0 %v202
    %518 = vmatprep.subr.mxu0 %v205
    %519 = vmatpush1.msra.mxu0 %v204
    %520 = vmatprep.subr.mxu0 %v207
    %521 = vmatpush1.msra.mxu0 %v206
    %522 = vmatprep.subr.mxu0 %v209
    %523 = vmatpush1.msra.mxu0 %v208
    %524 = vmatprep.subr.mxu0 %v211
    %525 = vmatpush1.msra.mxu0 %v210
    %526 = vmatprep.subr.mxu0 %v213
    %527 = vmatpush1.msra.mxu0 %v212
    %528 = vmatprep.subr.mxu0 %v215
    %529 = vmatpush1.msra.mxu0 %v214
    %530 = vmatprep.subr.mxu0 %v217
    %531 = vmatpush1.msra.mxu0 %v216
    %532 = vmatprep.subr.mxu0 %v219
    %533 = vmatpush1.msra.mxu0 %v218
    %534 = vmatprep.subr.mxu0 %v221
    %535 = vmatpush1.msra.mxu0 %v220
    %536 = vmatprep.subr.mxu0 %v223
    %537 = vmatpush1.msra.mxu0 %v222
    %538 = vmatprep.subr.mxu0 %v225
    %539 = vmatpush1.msra.mxu0 %v224
    %540 = vmatprep.subr.mxu0 %v227
    %541 = vmatpush1.msra.mxu0 %v226
    %542 = vmatprep.subr.mxu0 %v229
    %543 = vmatpush1.msra.mxu0 %v228
    %544 = vmatprep.subr.mxu0 %v231
    %545 = vmatpush1.msra.mxu0 %v230
    %546 = vmatprep.subr.mxu0 %v233
    %547 = vmatpush1.msra.mxu0 %v232
    %548 = vmatprep.subr.mxu0 %v235
    %549 = vmatpush1.msra.mxu0 %v234
    %550 = vmatprep.subr.mxu0 %v237
    %551 = vmatpush1.msra.mxu0 %v236
    %552 = vmatprep.subr.mxu0 %v239
    %553 = vmatpush1.msra.mxu0 %v238
    %554 = vmatprep.subr.mxu0 %v241
    %555 = vmatpush1.msra.mxu0 %v240
    %556 = vmatprep.subr.mxu0 %v243
    %557 = vmatpush1.msra.mxu0 %v242
    %558 = vmatprep.subr.mxu0 %v245
    %559 = vmatpush1.msra.mxu0 %v244
    %560 = vmatprep.subr.mxu0 %v247
    %561 = vmatpush1.msra.mxu0 %v246
    %562 = vmatprep.subr.mxu0 %v249
    %563 = vmatpush1.msra.mxu0 %v248
    %564 = vmatprep.subr.mxu0 %v251
    %565 = vmatpush1.msra.mxu0 %v250
    %566 = vmatprep.subr.mxu0 %v253
    %567 = vmatpush1.msra.mxu0 %v252
    %568 = vmatprep.mubr.f32.mxu0 %v352
    %569 = vmatmul.mubr.f32.gmra.mrb[0].mxu0 %v344
    %v570 = vpop.f32.mrb[0].mxu0
    %v571 = vadd.f32 %v500, %v570
    %v572 = vpop.f32.mrb[0].mxu0
    %v573 = vadd.f32 %v502, %v572
    %574 = vdwg.mxu0
    %575 = vmatprep.subr.mxu0 %v255
    %576 = vmatpush1.msra.mxu0 %v254
    %577 = vmatprep.subr.mxu0 %v257
    %578 = vmatpush1.msra.mxu0 %v256
    %579 = vmatprep.subr.mxu0 %v259
    %580 = vmatpush1.msra.mxu0 %v258
    %581 = vmatprep.subr.mxu0 %v261
    %582 = vmatpush1.msra.mxu0 %v260
    %583 = vmatprep.subr.mxu0 %v263
    %584 = vmatpush1.msra.mxu0 %v262
    %585 = vmatprep.subr.mxu0 %v265
    %586 = vmatpush1.msra.mxu0 %v264
    %587 = vmatprep.subr.mxu0 %v267
    %588 = vmatpush1.msra.mxu0 %v266
    %589 = vmatprep.subr.mxu0 %v269
    %590 = vmatpush1.msra.mxu0 %v268
    %591 = vmatprep.subr.mxu0 %v271
    %592 = vmatpush1.msra.mxu0 %v270
    %593 = vmatprep.subr.mxu0 %v273
    %594 = vmatpush1.msra.mxu0 %v272
    %595 = vmatprep.subr.mxu0 %v275
    %596 = vmatpush1.msra.mxu0 %v274
    %597 = vmatprep.subr.mxu0 %v277
    %598 = vmatpush1.msra.mxu0 %v276
    %599 = vmatprep.subr.mxu0 %v279
    %600 = vmatpush1.msra.mxu0 %v278
    %601 = vmatprep.subr.mxu0 %v281
    %602 = vmatpush1.msra.mxu0 %v280
    %603 = vmatprep.subr.mxu0 %v283
    %604 = vmatpush1.msra.mxu0 %v282
    %605 = vmatprep.subr.mxu0 %v285
    %606 = vmatpush1.msra.mxu0 %v284
    %607 = vmatprep.subr.mxu0 %v287
    %608 = vmatpush1.msra.mxu0 %v286
    %609 = vmatprep.subr.mxu0 %v289
    %610 = vmatpush1.msra.mxu0 %v288
    %611 = vmatprep.subr.mxu0 %v291
    %612 = vmatpush1.msra.mxu0 %v290
    %613 = vmatprep.subr.mxu0 %v293
    %614 = vmatpush1.msra.mxu0 %v292
    %615 = vmatprep.subr.mxu0 %v295
    %616 = vmatpush1.msra.mxu0 %v294
    %617 = vmatprep.subr.mxu0 %v297
    %618 = vmatpush1.msra.mxu0 %v296
    %619 = vmatprep.subr.mxu0 %v299
    %620 = vmatpush1.msra.mxu0 %v298
    %621 = vmatprep.subr.mxu0 %v301
    %622 = vmatpush1.msra.mxu0 %v300
    %623 = vmatprep.subr.mxu0 %v303
    %624 = vmatpush1.msra.mxu0 %v302
    %625 = vmatprep.subr.mxu0 %v305
    %626 = vmatpush1.msra.mxu0 %v304
    %627 = vmatprep.subr.mxu0 %v307
    %628 = vmatpush1.msra.mxu0 %v306
    %629 = vmatprep.subr.mxu0 %v309
    %630 = vmatpush1.msra.mxu0 %v308
    %631 = vmatprep.subr.mxu0 %v311
    %632 = vmatpush1.msra.mxu0 %v310
    %633 = vmatprep.subr.mxu0 %v313
    %634 = vmatpush1.msra.mxu0 %v312
    %635 = vmatprep.subr.mxu0 %v315
    %636 = vmatpush1.msra.mxu0 %v314
    %637 = vmatprep.subr.mxu0 %v317
    %638 = vmatpush1.msra.mxu0 %v316
    %639 = vmatprep.mubr.f32.mxu0 %v353
    %640 = vmatmul.mubr.f32.gmra.mrb[0].mxu0 %v351
    %v641 = vpop.f32.mrb[0].mxu0
    %v642 = vadd.f32 %v571, %v641
    %v643 = vpop.f32.mrb[0].mxu0
    %v644 = vadd.f32 %v573, %v643
    %645 = vdwg.mxu0
    %v646 = vld [vmem:[#allocation7] sm:$0xff]
    %v647 = vld [vmem:[#allocation7 + $0x8] sm:$0xff]
    %v648 = vld [vmem:[#allocation7 + $0x10] sm:$0xff]
    %v649 = vld [vmem:[#allocation7 + $0x18] sm:$0xff]
    %v650 = vld [vmem:[#allocation7 + $0x20] sm:$0xff]
    %v651 = vld [vmem:[#allocation7 + $0x28] sm:$0xff]
    %v652 = vld [vmem:[#allocation7 + $0x30] sm:$0xff]
    %v653 = vld [vmem:[#allocation7 + $0x38] sm:$0xff]
    %v654 = vld [vmem:[#allocation7 + $0x40] sm:$0xff]
    %v655 = vld [vmem:[#allocation7 + $0x48] sm:$0xff]
    %v656 = vld [vmem:[#allocation7 + $0x50] sm:$0xff]
    %v657 = vld [vmem:[#allocation7 + $0x58] sm:$0xff]
    %v658 = vld [vmem:[#allocation7 + $0x60] sm:$0xff]
    %v659 = vld [vmem:[#allocation7 + $0x68] sm:$0xff]
    %v660 = vld [vmem:[#allocation7 + $0x70] sm:$0xff]
    %v661 = vld [vmem:[#allocation7 + $0x78] sm:$0xff]
    %v662 = vld [vmem:[#allocation7 + $0x80] sm:$0xff]
    %v663 = vld [vmem:[#allocation7 + $0x88] sm:$0xff]
    %v664 = vld [vmem:[#allocation7 + $0x90] sm:$0xff]
    %v665 = vld [vmem:[#allocation7 + $0x98] sm:$0xff]
    %v666 = vld [vmem:[#allocation7 + $0xa0] sm:$0xff]
    %v667 = vld [vmem:[#allocation7 + $0xa8] sm:$0xff]
    %v668 = vld [vmem:[#allocation7 + $0xb0] sm:$0xff]
    %v669 = vld [vmem:[#allocation7 + $0xb8] sm:$0xff]
    %v670 = vld [vmem:[#allocation7 + $0xc0] sm:$0xff]
    %v671 = vld [vmem:[#allocation7 + $0xc8] sm:$0xff]
    %v672 = vld [vmem:[#allocation7 + $0xd0] sm:$0xff]
    %v673 = vld [vmem:[#allocation7 + $0xd8] sm:$0xff]
    %v674 = vld [vmem:[#allocation7 + $0xe0] sm:$0xff]
    %v675 = vld [vmem:[#allocation7 + $0xe8] sm:$0xff]
    %v676 = vld [vmem:[#allocation7 + $0xf0] sm:$0xff]
    %v677 = vld [vmem:[#allocation7 + $0xf8] sm:$0xff]
    %v678 = vld [vmem:[#allocation7 + $0x100] sm:$0xff]
    %v679 = vld [vmem:[#allocation7 + $0x108] sm:$0xff]
    %v680 = vld [vmem:[#allocation7 + $0x110] sm:$0xff]
    %v681 = vld [vmem:[#allocation7 + $0x118] sm:$0xff]
    %v682 = vld [vmem:[#allocation7 + $0x120] sm:$0xff]
    %v683 = vld [vmem:[#allocation7 + $0x128] sm:$0xff]
    %v684 = vld [vmem:[#allocation7 + $0x130] sm:$0xff]
    %v685 = vld [vmem:[#allocation7 + $0x138] sm:$0xff]
    %v686 = vld [vmem:[#allocation7 + $0x140] sm:$0xff]
    %v687 = vld [vmem:[#allocation7 + $0x148] sm:$0xff]
    %v688 = vld [vmem:[#allocation7 + $0x150] sm:$0xff]
    %v689 = vld [vmem:[#allocation7 + $0x158] sm:$0xff]
    %v690 = vld [vmem:[#allocation7 + $0x160] sm:$0xff]
    %v691 = vld [vmem:[#allocation7 + $0x168] sm:$0xff]
    %v692 = vld [vmem:[#allocation7 + $0x170] sm:$0xff]
    %v693 = vld [vmem:[#allocation7 + $0x178] sm:$0xff]
    %v694 = vld [vmem:[#allocation7 + $0x180] sm:$0xff]
    %v695 = vld [vmem:[#allocation7 + $0x188] sm:$0xff]
    %v696 = vld [vmem:[#allocation7 + $0x190] sm:$0xff]
    %v697 = vld [vmem:[#allocation7 + $0x198] sm:$0xff]
    %v698 = vld [vmem:[#allocation7 + $0x1a0] sm:$0xff]
    %v699 = vld [vmem:[#allocation7 + $0x1a8] sm:$0xff]
    %v700 = vld [vmem:[#allocation7 + $0x1b0] sm:$0xff]
    %v701 = vld [vmem:[#allocation7 + $0x1b8] sm:$0xff]
    %v702 = vld [vmem:[#allocation7 + $0x1c0] sm:$0xff]
    %v703 = vld [vmem:[#allocation7 + $0x1c8] sm:$0xff]
    %v704 = vld [vmem:[#allocation7 + $0x1d0] sm:$0xff]
    %v705 = vld [vmem:[#allocation7 + $0x1d8] sm:$0xff]
    %v706 = vld [vmem:[#allocation7 + $0x1e0] sm:$0xff]
    %v707 = vld [vmem:[#allocation7 + $0x1e8] sm:$0xff]
    %v708 = vld [vmem:[#allocation7 + $0x1f0] sm:$0xff]
    %v709 = vld [vmem:[#allocation7 + $0x1f8] sm:$0xff]
    %v710 = vld [vmem:[#allocation7 + $0x200] sm:$0xff]
    %v711 = vld [vmem:[#allocation7 + $0x208] sm:$0xff]
    %v712 = vld [vmem:[#allocation7 + $0x210] sm:$0xff]
    %v713 = vld [vmem:[#allocation7 + $0x218] sm:$0xff]
    %v714 = vld [vmem:[#allocation7 + $0x220] sm:$0xff]
    %v715 = vld [vmem:[#allocation7 + $0x228] sm:$0xff]
    %v716 = vld [vmem:[#allocation7 + $0x230] sm:$0xff]
    %v717 = vld [vmem:[#allocation7 + $0x238] sm:$0xff]
    %v718 = vld [vmem:[#allocation7 + $0x240] sm:$0xff]
    %v719 = vld [vmem:[#allocation7 + $0x248] sm:$0xff]
    %v720 = vld [vmem:[#allocation7 + $0x250] sm:$0xff]
    %v721 = vld [vmem:[#allocation7 + $0x258] sm:$0xff]
    %v722 = vld [vmem:[#allocation7 + $0x260] sm:$0xff]
    %v723 = vld [vmem:[#allocation7 + $0x268] sm:$0xff]
    %v724 = vld [vmem:[#allocation7 + $0x270] sm:$0xff]
    %v725 = vld [vmem:[#allocation7 + $0x278] sm:$0xff]
    %v726 = vld [vmem:[#allocation7 + $0x280] sm:$0xff]
    %v727 = vld [vmem:[#allocation7 + $0x288] sm:$0xff]
    %v728 = vld [vmem:[#allocation7 + $0x290] sm:$0xff]
    %v729 = vld [vmem:[#allocation7 + $0x298] sm:$0xff]
    %v730 = vld [vmem:[#allocation7 + $0x2a0] sm:$0xff]
    %v731 = vld [vmem:[#allocation7 + $0x2a8] sm:$0xff]
    %v732 = vld [vmem:[#allocation7 + $0x2b0] sm:$0xff]
    %v733 = vld [vmem:[#allocation7 + $0x2b8] sm:$0xff]
    %v734 = vld [vmem:[#allocation7 + $0x2c0] sm:$0xff]
    %v735 = vld [vmem:[#allocation7 + $0x2c8] sm:$0xff]
    %v736 = vld [vmem:[#allocation7 + $0x2d0] sm:$0xff]
    %v737 = vld [vmem:[#allocation7 + $0x2d8] sm:$0xff]
    %v738 = vld [vmem:[#allocation7 + $0x2e0] sm:$0xff]
    %v739 = vld [vmem:[#allocation7 + $0x2e8] sm:$0xff]
    %v740 = vld [vmem:[#allocation7 + $0x2f0] sm:$0xff]
    %v741 = vld [vmem:[#allocation7 + $0x2f8] sm:$0xff]
    %v742 = vld [vmem:[#allocation7 + $0x300] sm:$0xff]
    %v743 = vld [vmem:[#allocation7 + $0x308] sm:$0xff]
    %v744 = vld [vmem:[#allocation7 + $0x310] sm:$0xff]
    %v745 = vld [vmem:[#allocation7 + $0x318] sm:$0xff]
    %v746 = vld [vmem:[#allocation7 + $0x320] sm:$0xff]
    %v747 = vld [vmem:[#allocation7 + $0x328] sm:$0xff]
    %v748 = vld [vmem:[#allocation7 + $0x330] sm:$0xff]
    %v749 = vld [vmem:[#allocation7 + $0x338] sm:$0xff]
    %v750 = vld [vmem:[#allocation7 + $0x340] sm:$0xff]
    %v751 = vld [vmem:[#allocation7 + $0x348] sm:$0xff]
    %v752 = vld [vmem:[#allocation7 + $0x350] sm:$0xff]
    %v753 = vld [vmem:[#allocation7 + $0x358] sm:$0xff]
    %v754 = vld [vmem:[#allocation7 + $0x360] sm:$0xff]
    %v755 = vld [vmem:[#allocation7 + $0x368] sm:$0xff]
    %v756 = vld [vmem:[#allocation7 + $0x370] sm:$0xff]
    %v757 = vld [vmem:[#allocation7 + $0x378] sm:$0xff]
    %v758 = vld [vmem:[#allocation7 + $0x380] sm:$0xff]
    %v759 = vld [vmem:[#allocation7 + $0x388] sm:$0xff]
    %v760 = vld [vmem:[#allocation7 + $0x390] sm:$0xff]
    %v761 = vld [vmem:[#allocation7 + $0x398] sm:$0xff]
    %v762 = vld [vmem:[#allocation7 + $0x3a0] sm:$0xff]
    %v763 = vld [vmem:[#allocation7 + $0x3a8] sm:$0xff]
    %v764 = vld [vmem:[#allocation7 + $0x3b0] sm:$0xff]
    %v765 = vld [vmem:[#allocation7 + $0x3b8] sm:$0xff]
    %v766 = vld [vmem:[#allocation7 + $0x3c0] sm:$0xff]
    %v767 = vld [vmem:[#allocation7 + $0x3c8] sm:$0xff]
    %v768 = vld [vmem:[#allocation7 + $0x3d0] sm:$0xff]
    %v769 = vld [vmem:[#allocation7 + $0x3d8] sm:$0xff]
    %v770 = vld [vmem:[#allocation7 + $0x3e0] sm:$0xff]
    %v771 = vld [vmem:[#allocation7 + $0x3e8] sm:$0xff]
    %v772 = vld [vmem:[#allocation7 + $0x3f0] sm:$0xff]
    %v773 = vld [vmem:[#allocation7 + $0x3f8] sm:$0xff]
    %774 = vmatprep.subr.mxu0 %v647
    %775 = vmatpush1.msra.mxu0 %v646
    %776 = vmatprep.subr.mxu0 %v655
    %777 = vmatpush1.msra.mxu0 %v654
    %778 = vmatprep.subr.mxu0 %v663
    %779 = vmatpush1.msra.mxu0 %v662
    %780 = vmatprep.subr.mxu0 %v671
    %781 = vmatpush1.msra.mxu0 %v670
    %782 = vmatprep.subr.mxu0 %v679
    %783 = vmatpush1.msra.mxu0 %v678
    %784 = vmatprep.subr.mxu0 %v687
    %785 = vmatpush1.msra.mxu0 %v686
    %786 = vmatprep.subr.mxu0 %v695
    %787 = vmatpush1.msra.mxu0 %v694
    %788 = vmatprep.subr.mxu0 %v703
    %789 = vmatpush1.msra.mxu0 %v702
    %790 = vmatprep.subr.mxu0 %v711
    %791 = vmatpush1.msra.mxu0 %v710
    %792 = vmatprep.subr.mxu0 %v719
    %793 = vmatpush1.msra.mxu0 %v718
    %794 = vmatprep.subr.mxu0 %v727
    %795 = vmatpush1.msra.mxu0 %v726
    %796 = vmatprep.subr.mxu0 %v735
    %797 = vmatpush1.msra.mxu0 %v734
    %798 = vmatprep.subr.mxu0 %v743
    %799 = vmatpush1.msra.mxu0 %v742
    %800 = vmatprep.subr.mxu0 %v751
    %801 = vmatpush1.msra.mxu0 %v750
    %802 = vmatprep.subr.mxu0 %v759
    %803 = vmatpush1.msra.mxu0 %v758
    %804 = vmatprep.subr.mxu0 %v767
    %805 = vmatpush1.msra.mxu0 %v766
    %806 = vmatprep.subr.mxu0 0.0
    %807 = vmatpush1.msra.mxu0 0.0
    %808 = vmatprep.subr.mxu0 0.0
    %809 = vmatpush1.msra.mxu0 0.0
    %810 = vmatprep.subr.mxu0 0.0
    %811 = vmatpush1.msra.mxu0 0.0
    %812 = vmatprep.subr.mxu0 0.0
    %813 = vmatpush1.msra.mxu0 0.0
    %814 = vmatprep.subr.mxu0 0.0
    %815 = vmatpush1.msra.mxu0 0.0
    %816 = vmatprep.subr.mxu0 0.0
    %817 = vmatpush1.msra.mxu0 0.0
    %818 = vmatprep.subr.mxu0 0.0
    %819 = vmatpush1.msra.mxu0 0.0
    %820 = vmatprep.subr.mxu0 0.0
    %821 = vmatpush1.msra.mxu0 0.0
    %822 = vmatprep.subr.mxu0 0.0
    %823 = vmatpush1.msra.mxu0 0.0
    %824 = vmatprep.subr.mxu0 0.0
    %825 = vmatpush1.msra.mxu0 0.0
    %826 = vmatprep.subr.mxu0 0.0
    %827 = vmatpush1.msra.mxu0 0.0
    %828 = vmatprep.subr.mxu0 0.0
    %829 = vmatpush1.msra.mxu0 0.0
    %830 = vmatprep.subr.mxu0 0.0
    %831 = vmatpush1.msra.mxu0 0.0
    %832 = vmatprep.subr.mxu0 0.0
    %833 = vmatpush1.msra.mxu0 0.0
    %834 = vmatprep.subr.mxu0 0.0
    %835 = vmatpush1.msra.mxu0 0.0
    %836 = vmatprep.subr.mxu0 0.0
    %837 = vmatpush1.msra.mxu0 0.0
    %838 = vmatprep.mubr.f32.mxu0 0.0
    %839 = vmatmul.mubr.f32.gmra.mrb[0].mxu0 %v642
    %v840 = vpop.f32.mrb[0].mxu0
    %v841 = vadd.f32 0.0, %v840
    %v842 = vpop.f32.mrb[0].mxu0
    %v843 = vadd.f32 0.0, %v842
    %844 = vdwg.mxu0
    %845 = vmatprep.subr.mxu0 %v649
    %846 = vmatpush1.msra.mxu0 %v648
    %847 = vmatprep.subr.mxu0 %v657
    %848 = vmatpush1.msra.mxu0 %v656
    %849 = vmatprep.subr.mxu0 %v665
    %850 = vmatpush1.msra.mxu0 %v664
    %851 = vmatprep.subr.mxu0 %v673
    %852 = vmatpush1.msra.mxu0 %v672
    %853 = vmatprep.subr.mxu0 %v681
    %854 = vmatpush1.msra.mxu0 %v680
    %855 = vmatprep.subr.mxu0 %v689
    %856 = vmatpush1.msra.mxu0 %v688
    %857 = vmatprep.subr.mxu0 %v697
    %858 = vmatpush1.msra.mxu0 %v696
    %859 = vmatprep.subr.mxu0 %v705
    %860 = vmatpush1.msra.mxu0 %v704
    %861 = vmatprep.subr.mxu0 %v713
    %862 = vmatpush1.msra.mxu0 %v712
    %863 = vmatprep.subr.mxu0 %v721
    %864 = vmatpush1.msra.mxu0 %v720
    %865 = vmatprep.subr.mxu0 %v729
    %866 = vmatpush1.msra.mxu0 %v728
    %867 = vmatprep.subr.mxu0 %v737
    %868 = vmatpush1.msra.mxu0 %v736
    %869 = vmatprep.subr.mxu0 %v745
    %870 = vmatpush1.msra.mxu0 %v744
    %871 = vmatprep.subr.mxu0 %v753
    %872 = vmatpush1.msra.mxu0 %v752
    %873 = vmatprep.subr.mxu0 %v761
    %874 = vmatpush1.msra.mxu0 %v760
    %875 = vmatprep.subr.mxu0 %v769
    %876 = vmatpush1.msra.mxu0 %v768
    %877 = vmatprep.subr.mxu0 0.0
    %878 = vmatpush1.msra.mxu0 0.0
    %879 = vmatprep.subr.mxu0 0.0
    %880 = vmatpush1.msra.mxu0 0.0
    %881 = vmatprep.subr.mxu0 0.0
    %882 = vmatpush1.msra.mxu0 0.0
    %883 = vmatprep.subr.mxu0 0.0
    %884 = vmatpush1.msra.mxu0 0.0
    %885 = vmatprep.subr.mxu0 0.0
    %886 = vmatpush1.msra.mxu0 0.0
    %887 = vmatprep.subr.mxu0 0.0
    %888 = vmatpush1.msra.mxu0 0.0
    %889 = vmatprep.subr.mxu0 0.0
    %890 = vmatpush1.msra.mxu0 0.0
    %891 = vmatprep.subr.mxu0 0.0
    %892 = vmatpush1.msra.mxu0 0.0
    %893 = vmatprep.subr.mxu0 0.0
    %894 = vmatpush1.msra.mxu0 0.0
    %895 = vmatprep.subr.mxu0 0.0
    %896 = vmatpush1.msra.mxu0 0.0
    %897 = vmatprep.subr.mxu0 0.0
    %898 = vmatpush1.msra.mxu0 0.0
    %899 = vmatprep.subr.mxu0 0.0
    %900 = vmatpush1.msra.mxu0 0.0
    %901 = vmatprep.subr.mxu0 0.0
    %902 = vmatpush1.msra.mxu0 0.0
    %903 = vmatprep.subr.mxu0 0.0
    %904 = vmatpush1.msra.mxu0 0.0
    %905 = vmatprep.subr.mxu0 0.0
    %906 = vmatpush1.msra.mxu0 0.0
    %907 = vmatprep.subr.mxu0 0.0
    %908 = vmatpush1.msra.mxu0 0.0
    %909 = vmatprep.mubr.f32.mxu0 0.0
    %910 = vmatmul.mubr.f32.gmra.mrb[0].mxu0 %v642
    %v911 = vpop.f32.mrb[0].mxu0
    %v912 = vadd.f32 0.0, %v911
    %v913 = vpop.f32.mrb[0].mxu0
    %v914 = vadd.f32 0.0, %v913
    %915 = vdwg.mxu0
    %916 = vmatprep.subr.mxu0 %v651
    %917 = vmatpush1.msra.mxu0 %v650
    %918 = vmatprep.subr.mxu0 %v659
    %919 = vmatpush1.msra.mxu0 %v658
    %920 = vmatprep.subr.mxu0 %v667
    %921 = vmatpush1.msra.mxu0 %v666
    %922 = vmatprep.subr.mxu0 %v675
    %923 = vmatpush1.msra.mxu0 %v674
    %924 = vmatprep.subr.mxu0 %v683
    %925 = vmatpush1.msra.mxu0 %v682
    %926 = vmatprep.subr.mxu0 %v691
    %927 = vmatpush1.msra.mxu0 %v690
    %928 = vmatprep.subr.mxu0 %v699
    %929 = vmatpush1.msra.mxu0 %v698
    %930 = vmatprep.subr.mxu0 %v707
    %931 = vmatpush1.msra.mxu0 %v706
    %932 = vmatprep.subr.mxu0 %v715
    %933 = vmatpush1.msra.mxu0 %v714
    %934 = vmatprep.subr.mxu0 %v723
    %935 = vmatpush1.msra.mxu0 %v722
    %936 = vmatprep.subr.mxu0 %v731
    %937 = vmatpush1.msra.mxu0 %v730
    %938 = vmatprep.subr.mxu0 %v739
    %939 = vmatpush1.msra.mxu0 %v738
    %940 = vmatprep.subr.mxu0 %v747
    %941 = vmatpush1.msra.mxu0 %v746
    %942 = vmatprep.subr.mxu0 %v755
    %943 = vmatpush1.msra.mxu0 %v754
    %944 = vmatprep.subr.mxu0 %v763
    %945 = vmatpush1.msra.mxu0 %v762
    %946 = vmatprep.subr.mxu0 %v771
    %947 = vmatpush1.msra.mxu0 %v770
    %948 = vmatprep.subr.mxu0 0.0
    %949 = vmatpush1.msra.mxu0 0.0
    %950 = vmatprep.subr.mxu0 0.0
    %951 = vmatpush1.msra.mxu0 0.0
    %952 = vmatprep.subr.mxu0 0.0
    %953 = vmatpush1.msra.mxu0 0.0
    %954 = vmatprep.subr.mxu0 0.0
    %955 = vmatpush1.msra.mxu0 0.0
    %956 = vmatprep.subr.mxu0 0.0
    %957 = vmatpush1.msra.mxu0 0.0
    %958 = vmatprep.subr.mxu0 0.0
    %959 = vmatpush1.msra.mxu0 0.0
    %960 = vmatprep.subr.mxu0 0.0
    %961 = vmatpush1.msra.mxu0 0.0
    %962 = vmatprep.subr.mxu0 0.0
    %963 = vmatpush1.msra.mxu0 0.0
    %964 = vmatprep.subr.mxu0 0.0
    %965 = vmatpush1.msra.mxu0 0.0
    %966 = vmatprep.subr.mxu0 0.0
    %967 = vmatpush1.msra.mxu0 0.0
    %968 = vmatprep.subr.mxu0 0.0
    %969 = vmatpush1.msra.mxu0 0.0
    %970 = vmatprep.subr.mxu0 0.0
    %971 = vmatpush1.msra.mxu0 0.0
    %972 = vmatprep.subr.mxu0 0.0
    %973 = vmatpush1.msra.mxu0 0.0
    %974 = vmatprep.subr.mxu0 0.0
    %975 = vmatpush1.msra.mxu0 0.0
    %976 = vmatprep.subr.mxu0 0.0
    %977 = vmatpush1.msra.mxu0 0.0
    %978 = vmatprep.subr.mxu0 0.0
    %979 = vmatpush1.msra.mxu0 0.0
    %980 = vmatprep.mubr.f32.mxu0 0.0
    %981 = vmatmul.mubr.f32.gmra.mrb[0].mxu0 %v642
    %v982 = vpop.f32.mrb[0].mxu0
    %v983 = vadd.f32 0.0, %v982
    %v984 = vpop.f32.mrb[0].mxu0
    %v985 = vadd.f32 0.0, %v984
    %986 = vdwg.mxu0
    %987 = vmatprep.subr.mxu0 %v653
    %988 = vmatpush1.msra.mxu0 %v652
    %989 = vmatprep.subr.mxu0 %v661
    %990 = vmatpush1.msra.mxu0 %v660
    %991 = vmatprep.subr.mxu0 %v669
    %992 = vmatpush1.msra.mxu0 %v668
    %993 = vmatprep.subr.mxu0 %v677
    %994 = vmatpush1.msra.mxu0 %v676
    %995 = vmatprep.subr.mxu0 %v685
    %996 = vmatpush1.msra.mxu0 %v684
    %997 = vmatprep.subr.mxu0 %v693
    %998 = vmatpush1.msra.mxu0 %v692
    %999 = vmatprep.subr.mxu0 %v701
    %1000 = vmatpush1.msra.mxu0 %v700
    %1001 = vmatprep.subr.mxu0 %v709
    %1002 = vmatpush1.msra.mxu0 %v708
    %1003 = vmatprep.subr.mxu0 %v717
    %1004 = vmatpush1.msra.mxu0 %v716
    %1005 = vmatprep.subr.mxu0 %v725
    %1006 = vmatpush1.msra.mxu0 %v724
    %1007 = vmatprep.subr.mxu0 %v733
    %1008 = vmatpush1.msra.mxu0 %v732
    %1009 = vmatprep.subr.mxu0 %v741
    %1010 = vmatpush1.msra.mxu0 %v740
    %1011 = vmatprep.subr.mxu0 %v749
    %1012 = vmatpush1.msra.mxu0 %v748
    %1013 = vmatprep.subr.mxu0 %v757
    %1014 = vmatpush1.msra.mxu0 %v756
    %1015 = vmatprep.subr.mxu0 %v765
    %1016 = vmatpush1.msra.mxu0 %v764
    %1017 = vmatprep.subr.mxu0 %v773
    %1018 = vmatpush1.msra.mxu0 %v772
    %1019 = vmatprep.subr.mxu0 0.0
    %1020 = vmatpush1.msra.mxu0 0.0
    %1021 = vmatprep.subr.mxu0 0.0
    %1022 = vmatpush1.msra.mxu0 0.0
    %1023 = vmatprep.subr.mxu0 0.0
    %1024 = vmatpush1.msra.mxu0 0.0
    %1025 = vmatprep.subr.mxu0 0.0
    %1026 = vmatpush1.msra.mxu0 0.0
    %1027 = vmatprep.subr.mxu0 0.0
    %1028 = vmatpush1.msra.mxu0 0.0
    %1029 = vmatprep.subr.mxu0 0.0
    %1030 = vmatpush1.msra.mxu0 0.0
    %1031 = vmatprep.subr.mxu0 0.0
    %1032 = vmatpush1.msra.mxu0 0.0
    %1033 = vmatprep.subr.mxu0 0.0
    %1034 = vmatpush1.msra.mxu0 0.0
    %1035 = vmatprep.subr.mxu0 0.0
    %1036 = vmatpush1.msra.mxu0 0.0
    %1037 = vmatprep.subr.mxu0 0.0
    %1038 = vmatpush1.msra.mxu0 0.0
    %1039 = vmatprep.subr.mxu0 0.0
    %1040 = vmatpush1.msra.mxu0 0.0
    %1041 = vmatprep.subr.mxu0 0.0
    %1042 = vmatpush1.msra.mxu0 0.0
    %1043 = vmatprep.subr.mxu0 0.0
    %1044 = vmatpush1.msra.mxu0 0.0
    %1045 = vmatprep.subr.mxu0 0.0
    %1046 = vmatpush1.msra.mxu0 0.0
    %1047 = vmatprep.subr.mxu0 0.0
    %1048 = vmatpush1.msra.mxu0 0.0
    %1049 = vmatprep.subr.mxu0 0.0
    %1050 = vmatpush1.msra.mxu0 0.0
    %1051 = vmatprep.mubr.f32.mxu0 0.0
    %1052 = vmatmul.mubr.f32.gmra.mrb[0].mxu0 %v642
    %v1053 = vpop.f32.mrb[0].mxu0
    %v1054 = vadd.f32 0.0, %v1053
    %v1055 = vpop.f32.mrb[0].mxu0
    %v1056 = vadd.f32 0.0, %v1055
    %1057 = vdwg.mxu0
    %v1066 = vcombine.low %v841, %v843
    %v1067 = vcombine.low %v912, %v914
    %v1069 = vunpack.c.l.s4 1983009808
    %v1070 = vunpack.c.0.s8 %v1069
    %v1071 = vlaneseq
    %v1072 = vshrl.u32 %v1071, 7
    %v1073 = vsub.s32 %v1070, %v1072
    %v1074 = vrot.slane %v1066, %v1073
    %v1076 = vunpack.c.l.s4 1983009808
    %v1077 = vunpack.c.0.s8 %v1076
    %v1078 = vlaneseq
    %v1079 = vshrl.u32 %v1078, 7
    %v1080 = vsub.s32 %v1077, %v1079
    %v1081 = vrot.slane %v1067, %v1080
    %v1082 = vcombine.low %v1074, %v1081
    %v1083 = vcombine.low %v983, %v985
    %v1084 = vcombine.low %v1054, %v1056
    %v1086 = vunpack.c.l.s4 1983009808
    %v1087 = vunpack.c.0.s8 %v1086
    %v1088 = vlaneseq
    %v1089 = vshrl.u32 %v1088, 7
    %v1090 = vsub.s32 %v1087, %v1089
    %v1091 = vrot.slane %v1083, %v1090
    %v1093 = vunpack.c.l.s4 1983009808
    %v1094 = vunpack.c.0.s8 %v1093
    %v1095 = vlaneseq
    %v1096 = vshrl.u32 %v1095, 7
    %v1097 = vsub.s32 %v1094, %v1096
    %v1098 = vrot.slane %v1084, %v1097
    %v1099 = vcombine.low %v1091, %v1098
    %1102 = vst [vmem:[#allocation8] sm:$0xff] %v1082
    %1103 = vst [vmem:[#allocation8 + $0x8] sm:$0xff] %v1099
    %v1104 = vmul.f32 %v642, %v642
    %vm1105 = vcmask 1041408
    %v1106 = vsel %vm1105, %v1104, 0.0
    %v1107 = vrot.slane %v1106, 4
    %v1108 = vadd.f32 %v1106, %v1107
    %v1109 = vrot.slane %v1108, 2
    %v1110 = vadd.f32 %v1108, %v1109
    %v1111 = vrot.slane %v1110, 1
    %v1112 = vadd.f32 %v1110, %v1111
    %1113 = vst [vmem:[#allocation9] sm:$0x1] %v1112
    %v1114 = vsub.f32 %v644, %v642
    %v1115 = vmul.f32 %v1114, %v1114
    %v1116 = vsel %vm1105, %v1115, 0.0
    %v1117 = vrot.slane %v1116, 4
    %v1118 = vadd.f32 %v1116, %v1117
    %v1119 = vrot.slane %v1118, 2
    %v1120 = vadd.f32 %v1118, %v1119
    %v1121 = vrot.slane %v1120, 1
    %v1122 = vadd.f32 %v1120, %v1121
    %1123 = vst [vmem:[#allocation11] sm:$0x1] %v1122
    %v1124 = vsub.f32 %v841, %v327
    %v1125 = vsub.f32 %v843, %v335
    %v1126 = vsub.f32 %v912, %v334
    %v1127 = vsub.f32 %v914, %v336
    %v1128 = vsub.f32 %v983, %v344
    %v1129 = vsub.f32 %v985, %v352
    %v1130 = vsub.f32 %v1054, %v351
    %v1131 = vsub.f32 %v1056, %v353
    %v1132 = vmul.f32 %v1124, %v1124
    %v1133 = vmul.f32 %v1125, %v1125
    %v1134 = vmul.f32 %v1126, %v1126
    %v1135 = vmul.f32 %v1127, %v1127
    %v1136 = vmul.f32 %v1128, %v1128
    %v1137 = vmul.f32 %v1129, %v1129
    %v1138 = vmul.f32 %v1130, %v1130
    %v1139 = vmul.f32 %v1131, %v1131
    %v1140 = vsel %vm1105, %v1132, 0.0
    %v1141 = vrot.slane %v1140, 4
    %v1142 = vadd.f32 %v1140, %v1141
    %v1143 = vrot.slane %v1142, 2
    %v1144 = vadd.f32 %v1142, %v1143
    %v1145 = vrot.slane %v1144, 1
    %v1146 = vadd.f32 %v1144, %v1145
    %v1147 = vsel %vm1105, %v1133, 0.0
    %v1148 = vrot.slane %v1147, 4
    %v1149 = vadd.f32 %v1147, %v1148
    %v1150 = vrot.slane %v1149, 2
    %v1151 = vadd.f32 %v1149, %v1150
    %v1152 = vrot.slane %v1151, 1
    %v1153 = vadd.f32 %v1151, %v1152
    %v1154 = vsel %vm1105, %v1134, 0.0
    %v1155 = vrot.slane %v1154, 4
    %v1156 = vadd.f32 %v1154, %v1155
    %v1157 = vrot.slane %v1156, 2
    %v1158 = vadd.f32 %v1156, %v1157
    %v1159 = vrot.slane %v1158, 1
    %v1160 = vadd.f32 %v1158, %v1159
    %v1161 = vsel %vm1105, %v1135, 0.0
    %v1162 = vrot.slane %v1161, 4
    %v1163 = vadd.f32 %v1161, %v1162
    %v1164 = vrot.slane %v1163, 2
    %v1165 = vadd.f32 %v1163, %v1164
    %v1166 = vrot.slane %v1165, 1
    %v1167 = vadd.f32 %v1165, %v1166
    %v1168 = vsel %vm1105, %v1136, 0.0
    %v1169 = vrot.slane %v1168, 4
    %v1170 = vadd.f32 %v1168, %v1169
    %v1171 = vrot.slane %v1170, 2
    %v1172 = vadd.f32 %v1170, %v1171
    %v1173 = vrot.slane %v1172, 1
    %v1174 = vadd.f32 %v1172, %v1173
    %v1175 = vsel %vm1105, %v1137, 0.0
    %v1176 = vrot.slane %v1175, 4
    %v1177 = vadd.f32 %v1175, %v1176
    %v1178 = vrot.slane %v1177, 2
    %v1179 = vadd.f32 %v1177, %v1178
    %v1180 = vrot.slane %v1179, 1
    %v1181 = vadd.f32 %v1179, %v1180
    %v1182 = vsel %vm1105, %v1138, 0.0
    %v1183 = vrot.slane %v1182, 4
    %v1184 = vadd.f32 %v1182, %v1183
    %v1185 = vrot.slane %v1184, 2
    %v1186 = vadd.f32 %v1184, %v1185
    %v1187 = vrot.slane %v1186, 1
    %v1188 = vadd.f32 %v1186, %v1187
    %v1189 = vsel %vm1105, %v1139, 0.0
    %v1190 = vrot.slane %v1189, 4
    %v1191 = vadd.f32 %v1189, %v1190
    %v1192 = vrot.slane %v1191, 2
    %v1193 = vadd.f32 %v1191, %v1192
    %v1194 = vrot.slane %v1193, 1
    %v1195 = vadd.f32 %v1193, %v1194
    %v1204 = vcombine.low %v1146, %v1153
    %v1205 = vcombine.low %v1160, %v1167
    %v1206 = vcombine.low %v1174, %v1181
    %v1207 = vcombine.low %v1188, %v1195
    %v1209 = vunpack.c.l.s4 1966171168
    %v1210 = vunpack.c.0.s8 %v1209
    %v1211 = vlaneseq
    %v1212 = vshrl.u32 %v1211, 7
    %v1213 = vsub.s32 %v1210, %v1212
    %v1214 = vrot.slane %v1204, %v1213
    %v1216 = vunpack.c.l.s4 1966171168
    %v1217 = vunpack.c.0.s8 %v1216
    %v1218 = vlaneseq
    %v1219 = vshrl.u32 %v1218, 7
    %v1220 = vsub.s32 %v1217, %v1219
    %v1221 = vrot.slane %v1205, %v1220
    %v1223 = vunpack.c.l.s4 1966171168
    %v1224 = vunpack.c.0.s8 %v1223
    %v1225 = vlaneseq
    %v1226 = vshrl.u32 %v1225, 7
    %v1227 = vsub.s32 %v1224, %v1226
    %v1228 = vrot.slane %v1206, %v1227
    %v1230 = vunpack.c.l.s4 1966171168
    %v1231 = vunpack.c.0.s8 %v1230
    %v1232 = vlaneseq
    %v1233 = vshrl.u32 %v1232, 7
    %v1234 = vsub.s32 %v1231, %v1233
    %v1235 = vrot.slane %v1207, %v1234
    %v1236 = vcombine.low %v1214, %v1221
    %v1237 = vcombine.low %v1228, %v1235
    %v1239 = vunpack.c.l.s4 1966171168
    %v1240 = vunpack.c.0.s8 %v1239
    %v1241 = vlaneseq
    %v1242 = vshrl.u32 %v1241, 7
    %v1243 = vsub.s32 %v1240, %v1242
    %v1244 = vrot.slane %v1236, %v1243
    %v1246 = vunpack.c.l.s4 1966171168
    %v1247 = vunpack.c.0.s8 %v1246
    %v1248 = vlaneseq
    %v1249 = vshrl.u32 %v1248, 7
    %v1250 = vsub.s32 %v1247, %v1249
    %v1251 = vrot.slane %v1237, %v1250
    %v1252 = vcombine.low %v1244, %v1251
    %1254 = vst [vmem:[#allocation12] sm:$0xff] %v1252
    // Predicated region
    $region26: #{tpu_custom_call.1} parent=1 // pred_check
      _
    $region27: #{tpu_custom_call.1} parent=1 // pred_check_branch
      %1256 = sbr.rel (0) target = $region29
    $region28: #{tpu_custom_call.1} parent=1 // pred_region
      %s1258 = ssub.s32 256, 256
      %1259 = vsyncadd [#allocation4], %s1258
      %s1261 = sshll.u32 [#allocation8], 4
      %s1262 = int_to_ptr.vmem [resolvable:$true] %s1261
      %1264 = dma.vmem_to_hbm [thread:$0]  %s1262, 256, %s3, [#allocation4]
    $region29: #{tpu_custom_call.1} parent=1 // pred_fallthru
      _
    // Predicated region
    $region30: #{tpu_custom_call.1} parent=1 // pred_check
      _
    $region31: #{tpu_custom_call.1} parent=1 // pred_check_branch
      %1266 = sbr.rel (0) target = $region33
    $region32: #{tpu_custom_call.1} parent=1 // pred_region
      %s1268 = ssub.s32 16, 16
      %1269 = vsyncadd [#allocation10], %s1268
      %s1271 = sshll.u32 [#allocation9], 4
      %s1272 = int_to_ptr.vmem [resolvable:$true] %s1271
      %1274 = dma.vmem_to_hbm [thread:$0]  %s1272, 16, %s4, [#allocation10]
    $region33: #{tpu_custom_call.1} parent=1 // pred_fallthru
      _
    // Predicated region
    $region34: #{tpu_custom_call.1} parent=1 // pred_check
      _
    $region35: #{tpu_custom_call.1} parent=1 // pred_check_branch
      %1276 = sbr.rel (0) target = $region37
    $region36: #{tpu_custom_call.1} parent=1 // pred_region
      %s1278 = ssub.s32 16, 16
      %1279 = vsyncadd [#allocation10], %s1278
      %s1281 = sshll.u32 [#allocation11], 4
      %s1282 = int_to_ptr.vmem [resolvable:$true] %s1281
      %1284 = dma.vmem_to_hbm [thread:$0]  %s1282, 16, %s5, [#allocation10]
    $region37: #{tpu_custom_call.1} parent=1 // pred_fallthru
      _
    // Predicated region
    $region38: #{tpu_custom_call.1} parent=1 // pred_check
      _
    $region39: #{tpu_custom_call.1} parent=1 // pred_check_branch
      %1286 = sbr.rel (0) target = $region41
    $region40: #{tpu_custom_call.1} parent=1 // pred_region
      %s1288 = ssub.s32 128, 128
      %1289 = vsyncadd [#allocation13], %s1288
      %s1291 = sshll.u32 [#allocation12], 4
      %s1292 = int_to_ptr.vmem [resolvable:$true] %s1291
      %1294 = dma.vmem_to_hbm [thread:$0]  %s1292, 128, %s6, [#allocation13]
    $region41: #{tpu_custom_call.1} parent=1 // pred_fallthru
      _
    // Predicated region
    $region42: #{tpu_custom_call.1} parent=1 // pred_check
      _
    $region43: #{tpu_custom_call.1} parent=1 // pred_check_branch
      %1296 = sbr.rel (0) target = $region45
    $region44: #{tpu_custom_call.1} parent=1 // pred_region
      %1297 = dma.done [#allocation4], 256
    $region45: #{tpu_custom_call.1} parent=1 // pred_fallthru
      _
    // Predicated region
    $region46: #{tpu_custom_call.1} parent=1 // pred_check
      _
    $region47: #{tpu_custom_call.1} parent=1 // pred_check_branch
      %1299 = sbr.rel (0) target = $region49
    $region48: #{tpu_custom_call.1} parent=1 // pred_region
      %1300 = dma.done [#allocation10], 16
    $region49: #{tpu_custom_call.1} parent=1 // pred_fallthru
      _
    // Predicated region
    $region50: #{tpu_custom_call.1} parent=1 // pred_check
      _
    $region51: #{tpu_custom_call.1} parent=1 // pred_check_branch
      %1302 = sbr.rel (0) target = $region53
    $region52: #{tpu_custom_call.1} parent=1 // pred_region
      %1303 = dma.done [#allocation10], 16
    $region53: #{tpu_custom_call.1} parent=1 // pred_fallthru
      _
    // Predicated region
    $region54: #{tpu_custom_call.1} parent=1 // pred_check
      _
    $region55: #{tpu_custom_call.1} parent=1 // pred_check_branch
      %1305 = sbr.rel (0) target = $region57
    $region56: #{tpu_custom_call.1} parent=1 // pred_region
      %1306 = dma.done [#allocation13], 128
    $region57: #{tpu_custom_call.1} parent=1 // pred_fallthru
      _
    %1307 = vsyncpa [#allocation3], 1
    %1308 = vsyncpa [#allocation6], 1
    %1309 = vsyncpa [#allocation4], 1
    %1310 = vsyncpa [#allocation10], 1
    %1311 = vsyncpa [#allocation13], 1

</llo_original>
